<compile_context>
chip_gen: v7x
topology: tpu7x:2x2x1
jax: 0.10.0
libtpu: 0.0.40
codegen_flags: <defaults>
</compile_context>

<pallas_src>
import functools
import math

import jax
import jax.numpy as jnp
from jax import lax
from jax.experimental import pallas as pl
from jax.experimental.pallas import tpu as pltpu

NUM_HEADS = 2
LN_EPS = 1e-6       # module explicitly uses eps=1e-06
NEG_INF = -1e30     # additive mask value for cross-batch attention entries


def _layernorm(x, gamma, beta):
    # PyTorch LayerNorm: biased variance over the last dim.
    mean = jnp.mean(x, axis=-1, keepdims=True)
    var = jnp.mean((x - mean) ** 2, axis=-1, keepdims=True)
    inv = lax.rsqrt(var + LN_EPS)
    return (x - mean) * inv * gamma + beta


def transformer_block_kernel(
    x_ref,
    wqkv_ref, bqkv_ref,
    wo_ref, bo_ref,
    g1_ref, be1_ref,
    w1_ref, b1_ref,
    w2_ref, b2_ref,
    g2_ref, be2_ref,
    out_ref,
    *,
    num_heads,
    batch,
):
    x = x_ref[...]                                # (N, E), N = S*B rows (all batches)
    N, E = x.shape
    hd = E // num_heads
    scale = 1.0 / math.sqrt(hd)

    # --- Fused QKV projection: one wide matmul instead of three narrow ones ---
    qkv = jnp.dot(x, wqkv_ref[...], preferred_element_type=jnp.float32) + bqkv_ref[...]
    wo = wo_ref[...]                              # (E, E)

    # --- Cross-batch mask, built in-kernel (row i of x is batch element i % batch) ---
    row_b = lax.broadcasted_iota(jnp.int32, (N, N), 0) % batch
    col_b = lax.broadcasted_iota(jnp.int32, (N, N), 1) % batch
    mask = jnp.where(row_b == col_b, 0.0, NEG_INF).astype(jnp.float32)

    # --- Multi-head self-attention (heads via static loop; no concat) ---
    attn_out = None
    for h in range(num_heads):                    # static, num_heads = 2
        qh = qkv[:, h * hd:(h + 1) * hd]          # (N, hd)
        kh = qkv[:, E + h * hd:E + (h + 1) * hd]
        vh = qkv[:, 2 * E + h * hd:2 * E + (h + 1) * hd]
        # scores = qh @ kh^T without an explicit transpose (contract last dims)
        s = lax.dot_general(qh, kh, (((1,), (1,)), ((), ())),
                            preferred_element_type=jnp.float32) * scale
        s = s + mask                              # block cross-batch attention exactly
        s = s - jnp.max(s, axis=-1, keepdims=True)
        p = jnp.exp(s)                            # masked entries underflow to exactly 0
        p = p * pl.reciprocal(jnp.sum(p, axis=-1, keepdims=True), approx=False)
        oh = jnp.dot(p, vh, preferred_element_type=jnp.float32)          # (N, hd)
        contrib = jnp.dot(oh, wo[h * hd:(h + 1) * hd, :],
                          preferred_element_type=jnp.float32)            # (N, E)
        attn_out = contrib if attn_out is None else attn_out + contrib
    attn_out = attn_out + bo_ref[...]

    # --- dropout1 = identity (eval) ; residual + LayerNorm 1 ---
    out1 = _layernorm(attn_out + x, g1_ref[...], be1_ref[...])

    # --- Feed-forward: Linear -> ReLU -> Linear ---
    ff = jnp.dot(out1, w1_ref[...], preferred_element_type=jnp.float32) + b1_ref[...]
    ff = jnp.maximum(ff, 0.0)
    ff = jnp.dot(ff, w2_ref[...], preferred_element_type=jnp.float32) + b2_ref[...]

    # --- dropout2 = identity (eval) ; residual + LayerNorm 2 ---
    out_ref[...] = _layernorm(out1 + ff, g2_ref[...], be2_ref[...]).astype(out_ref.dtype)


def transformer_block_eeg_encoder(x_sbe, params):
    """x_sbe: (S, B, E) — same layout as the PyTorch module (batch_first=False)."""
    S, B, E = x_sbe.shape
    F = params["w1"].shape[1]
    N = S * B

    # Free reshape (collapses major dims, no HBM round trip) instead of transposes.
    x2 = x_sbe.reshape(N, E)

    def full(shape):
        nd = len(shape)
        return pl.BlockSpec(shape, lambda i: (0,) * nd)

    kernel = functools.partial(transformer_block_kernel, num_heads=NUM_HEADS, batch=B)
    out2 = pl.pallas_call(
        kernel,
        out_shape=jax.ShapeDtypeStruct((N, E), x_sbe.dtype),
        grid_spec=pltpu.PrefetchScalarGridSpec(
            num_scalar_prefetch=0,
            grid=(1,),                                   # single invocation: whole problem
            in_specs=[
                full((N, E)),                            # x (flattened batch*seq)
                full((E, 3 * E)), full((1, 3 * E)),      # fused Wqkv, bqkv
                full((E, E)), full((1, E)),              # Wo, bo
                full((1, E)), full((1, E)),              # ln1 gamma, beta
                full((E, F)), full((1, F)),              # W1, b1
                full((F, E)), full((1, E)),              # W2, b2
                full((1, E)), full((1, E)),              # ln2 gamma, beta
            ],
            out_specs=full((N, E)),
        ),
        compiler_params=pltpu.CompilerParams(dimension_semantics=("arbitrary",)),
    )(
        x2,
        params["wqkv"], params["bqkv"],
        params["wo"], params["bo"],
        params["g1"], params["be1"],
        params["w1"], params["b1"],
        params["w2"], params["b2"],
        params["g2"], params["be2"],
    )
    return out2.reshape(S, B, E)


def make_params(key, embed_dim, ff_dim):
    ks = jax.random.split(key, 8)
    scale = 0.05
    E = embed_dim
    # Fused in-projection stored transposed as (E, 3E) with columns [Wq | Wk | Wv],
    # matching PyTorch's single in_proj_weight/in_proj_bias but so the kernel does x @ W.
    return {
        "wqkv": scale * jax.random.normal(ks[0], (E, 3 * E), jnp.float32),
        "bqkv": scale * jax.random.normal(ks[1], (1, 3 * E), jnp.float32),
        "wo": scale * jax.random.normal(ks[2], (E, E), jnp.float32),
        "bo": scale * jax.random.normal(ks[3], (1, E), jnp.float32),
        "g1": jnp.ones((1, E), jnp.float32),
        "be1": jnp.zeros((1, E), jnp.float32),
        "w1": scale * jax.random.normal(ks[4], (E, ff_dim), jnp.float32),
        "b1": scale * jax.random.normal(ks[5], (1, ff_dim), jnp.float32),
        "w2": scale * jax.random.normal(ks[6], (ff_dim, E), jnp.float32),
        "b2": scale * jax.random.normal(ks[7], (1, E), jnp.float32),
        "g2": jnp.ones((1, E), jnp.float32),
        "be2": jnp.zeros((1, E), jnp.float32),
    }


def reference(x_sbe, p):
    """Pure-JAX reference replicating the PyTorch eval-mode forward."""
    S, B, E = x_sbe.shape
    hd = E // NUM_HEADS
    wq, wk, wv = p["wqkv"][:, :E], p["wqkv"][:, E:2 * E], p["wqkv"][:, 2 * E:]
    bq, bk, bv = p["bqkv"][0, :E], p["bqkv"][0, E:2 * E], p["bqkv"][0, 2 * E:]
    q = x_sbe @ wq + bq
    k = x_sbe @ wk + bk
    v = x_sbe @ wv + bv
    qh = q.reshape(S, B, NUM_HEADS, hd)
    kh = k.reshape(S, B, NUM_HEADS, hd)
    vh = v.reshape(S, B, NUM_HEADS, hd)
    scores = jnp.einsum("sbhd,tbhd->bhst", qh, kh) / math.sqrt(hd)
    probs = jax.nn.softmax(scores, axis=-1)
    attn = jnp.einsum("bhst,tbhd->sbhd", probs, vh).reshape(S, B, E)
    attn_out = attn @ p["wo"] + p["bo"][0]
    out1 = _layernorm(attn_out + x_sbe, p["g1"][0], p["be1"][0])
    ff = jnp.maximum(out1 @ p["w1"] + p["b1"][0], 0.0) @ p["w2"] + p["b2"][0]
    return _layernorm(out1 + ff, p["g2"][0], p["be2"][0])


if __name__ == "__main__":
    S, B, E, F = 8, 2, 32, 64  # seq, batch, embed_dim, ff_dim
    key = jax.random.PRNGKey(0)
    kx, kp = jax.random.split(key)
    x = jax.random.normal(kx, (S, B, E), jnp.float32)
    params = make_params(kp, E, F)

    out = transformer_block_eeg_encoder(x, params)
    out = jax.block_until_ready(out)

    ref = reference(x, params)
    assert out.shape == (S, B, E)
    err = jnp.max(jnp.abs(out - ref))
    assert jnp.allclose(out, ref, atol=1e-4, rtol=1e-4), f"max abs err {err}"
    # TODO(synk): train-mode dropout (p=0.5) would need pltpu.prng_* masking; eval mode is identity.
    print("KERNEL_OK")
</pallas_src>

<mosaic_0001>
module attributes {stable_mosaic.version = 11 : i64} {
  func.func @transformer_block_kernel(%arg0: i32, %arg1: memref<16x32xf32, #tpu.memory_space<vmem>>, %arg2: memref<32x96xf32, #tpu.memory_space<vmem>>, %arg3: memref<1x96xf32, #tpu.memory_space<vmem>>, %arg4: memref<32x32xf32, #tpu.memory_space<vmem>>, %arg5: memref<1x32xf32, #tpu.memory_space<vmem>>, %arg6: memref<1x32xf32, #tpu.memory_space<vmem>>, %arg7: memref<1x32xf32, #tpu.memory_space<vmem>>, %arg8: memref<32x64xf32, #tpu.memory_space<vmem>>, %arg9: memref<1x64xf32, #tpu.memory_space<vmem>>, %arg10: memref<64x32xf32, #tpu.memory_space<vmem>>, %arg11: memref<1x32xf32, #tpu.memory_space<vmem>>, %arg12: memref<1x32xf32, #tpu.memory_space<vmem>>, %arg13: memref<1x32xf32, #tpu.memory_space<vmem>>, %arg14: memref<16x32xf32, #tpu.memory_space<vmem>>) attributes {dimension_semantics = [#tpu.dimension_semantics<arbitrary>], iteration_bounds = array<i64: 1>, scalar_prefetch = 0 : i64, scratch_operands = 0 : i64, tpu.core_type = #tpu.core_type<tc>, window_params = [{pipeline_mode = #tpu.pipeline_mode<synchronous>, transform_indices = @transform_0, window_bounds = array<i64: 16, 32>}, {pipeline_mode = #tpu.pipeline_mode<synchronous>, transform_indices = @transform_1, window_bounds = array<i64: 32, 96>}, {pipeline_mode = #tpu.pipeline_mode<synchronous>, transform_indices = @transform_2, window_bounds = array<i64: 1, 96>}, {pipeline_mode = #tpu.pipeline_mode<synchronous>, transform_indices = @transform_3, window_bounds = array<i64: 32, 32>}, {pipeline_mode = #tpu.pipeline_mode<synchronous>, transform_indices = @transform_4, window_bounds = array<i64: 1, 32>}, {pipeline_mode = #tpu.pipeline_mode<synchronous>, transform_indices = @transform_5, window_bounds = array<i64: 1, 32>}, {pipeline_mode = #tpu.pipeline_mode<synchronous>, transform_indices = @transform_6, window_bounds = array<i64: 1, 32>}, {pipeline_mode = #tpu.pipeline_mode<synchronous>, transform_indices = @transform_7, window_bounds = array<i64: 32, 64>}, {pipeline_mode = #tpu.pipeline_mode<synchronous>, transform_indices = @transform_8, window_bounds = array<i64: 1, 64>}, {pipeline_mode = #tpu.pipeline_mode<synchronous>, transform_indices = @transform_9, window_bounds = array<i64: 64, 32>}, {pipeline_mode = #tpu.pipeline_mode<synchronous>, transform_indices = @transform_10, window_bounds = array<i64: 1, 32>}, {pipeline_mode = #tpu.pipeline_mode<synchronous>, transform_indices = @transform_11, window_bounds = array<i64: 1, 32>}, {pipeline_mode = #tpu.pipeline_mode<synchronous>, transform_indices = @transform_12, window_bounds = array<i64: 1, 32>}, {pipeline_mode = #tpu.pipeline_mode<synchronous>, transform_indices = @transform_13, window_bounds = array<i64: 16, 32>}]} {
    %c0 = arith.constant 0 : index
    %c0_0 = arith.constant 0 : index
    %0 = vector.load %arg1[%c0, %c0_0] : memref<16x32xf32, #tpu.memory_space<vmem>>, vector<16x32xf32>
    %c0_1 = arith.constant 0 : index
    %c0_2 = arith.constant 0 : index
    %1 = vector.load %arg2[%c0_1, %c0_2] : memref<32x96xf32, #tpu.memory_space<vmem>>, vector<32x96xf32>
    %cst = arith.constant dense<0.000000e+00> : vector<16x96xf32>
    %2 = tpu.matmul %0, %1, %cst {dimension_numbers = #tpu.dot_dimension_numbers<[1], [0], [0], [1], [0, 0, 1, 1], [], []>} : vector<16x32xf32>, vector<32x96xf32>, vector<16x96xf32> -> vector<16x96xf32>
    %c0_3 = arith.constant 0 : index
    %c0_4 = arith.constant 0 : index
    %3 = vector.load %arg3[%c0_3, %c0_4] : memref<1x96xf32, #tpu.memory_space<vmem>>, vector<1x96xf32>
    %4 = vector.broadcast %3 : vector<1x96xf32> to vector<16x96xf32>
    %5 = arith.addf %2, %4 : vector<16x96xf32>
    %c0_5 = arith.constant 0 : index
    %c0_6 = arith.constant 0 : index
    %6 = vector.load %arg4[%c0_5, %c0_6] : memref<32x32xf32, #tpu.memory_space<vmem>>, vector<32x32xf32>
    %7 = tpu.iota {dimensions = array<i32: 0>} : vector<16x16xi32>
    %c2_i32 = arith.constant 2 : i32
    %c0_i32 = arith.constant 0 : i32
    %8 = arith.cmpi eq, %c2_i32, %c0_i32 : i32
    %c1_i32 = arith.constant 1 : i32
    %9 = arith.select %8, %c1_i32, %c2_i32 : i32
    %10 = vector.broadcast %9 : i32 to vector<16x16xi32>
    %11 = arith.remsi %7, %10 : vector<16x16xi32>
    %c0_i32_7 = arith.constant 0 : i32
    %12 = vector.broadcast %c0_i32_7 : i32 to vector<16x16xi32>
    %13 = arith.cmpi ne, %11, %12 : vector<16x16xi32>
    %c0_i32_8 = arith.constant 0 : i32
    %14 = vector.broadcast %c0_i32_8 : i32 to vector<16x16xi32>
    %15 = arith.cmpi slt, %11, %14 : vector<16x16xi32>
    %c0_i32_9 = arith.constant 0 : i32
    %16 = arith.cmpi slt, %9, %c0_i32_9 : i32
    %17 = vector.broadcast %16 : i1 to vector<16x16xi1>
    %18 = vector.broadcast %17 : vector<16x16xi1> to vector<16x16xi1>
    %19 = arith.xori %15, %18 : vector<16x16xi1>
    %20 = arith.andi %19, %13 : vector<16x16xi1>
    %21 = vector.broadcast %9 : i32 to vector<16x16xi32>
    %22 = arith.addi %11, %21 : vector<16x16xi32>
    %23 = arith.select %20, %22, %11 : vector<16x16xi1>, vector<16x16xi32>
    %24 = tpu.iota {dimensions = array<i32: 1>} : vector<16x16xi32>
    %c2_i32_10 = arith.constant 2 : i32
    %c0_i32_11 = arith.constant 0 : i32
    %25 = arith.cmpi eq, %c2_i32_10, %c0_i32_11 : i32
    %c1_i32_12 = arith.constant 1 : i32
    %26 = arith.select %25, %c1_i32_12, %c2_i32_10 : i32
    %27 = vector.broadcast %26 : i32 to vector<16x16xi32>
    %28 = arith.remsi %24, %27 : vector<16x16xi32>
    %c0_i32_13 = arith.constant 0 : i32
    %29 = vector.broadcast %c0_i32_13 : i32 to vector<16x16xi32>
    %30 = arith.cmpi ne, %28, %29 : vector<16x16xi32>
    %c0_i32_14 = arith.constant 0 : i32
    %31 = vector.broadcast %c0_i32_14 : i32 to vector<16x16xi32>
    %32 = arith.cmpi slt, %28, %31 : vector<16x16xi32>
    %c0_i32_15 = arith.constant 0 : i32
    %33 = arith.cmpi slt, %26, %c0_i32_15 : i32
    %34 = vector.broadcast %33 : i1 to vector<16x16xi1>
    %35 = vector.broadcast %34 : vector<16x16xi1> to vector<16x16xi1>
    %36 = arith.xori %32, %35 : vector<16x16xi1>
    %37 = arith.andi %36, %30 : vector<16x16xi1>
    %38 = vector.broadcast %26 : i32 to vector<16x16xi32>
    %39 = arith.addi %28, %38 : vector<16x16xi32>
    %40 = arith.select %37, %39, %28 : vector<16x16xi1>, vector<16x16xi32>
    %41 = arith.cmpi eq, %23, %40 : vector<16x16xi32>
    %cst_16 = arith.constant 0.000000e+00 : f32
    %cst_17 = arith.constant -1.000000e+30 : f32
    %42 = vector.broadcast %cst_16 : f32 to vector<16x16xf32>
    %43 = vector.broadcast %cst_17 : f32 to vector<16x16xf32>
    %44 = arith.select %41, %42, %43 : vector<16x16xi1>, vector<16x16xf32>
    %45 = vector.extract_strided_slice %5 {offsets = [0, 0], sizes = [16, 16], strides = [1, 1]} : vector<16x96xf32> to vector<16x16xf32>
    %46 = vector.extract_strided_slice %5 {offsets = [0, 32], sizes = [16, 16], strides = [1, 1]} : vector<16x96xf32> to vector<16x16xf32>
    %47 = vector.extract_strided_slice %5 {offsets = [0, 64], sizes = [16, 16], strides = [1, 1]} : vector<16x96xf32> to vector<16x16xf32>
    %cst_18 = arith.constant dense<0.000000e+00> : vector<16x16xf32>
    %48 = tpu.matmul %45, %46, %cst_18 {dimension_numbers = #tpu.dot_dimension_numbers<[1], [1], [0], [0], [0, 0, 1, 0], [], []>} : vector<16x16xf32>, vector<16x16xf32>, vector<16x16xf32> -> vector<16x16xf32>
    %cst_19 = arith.constant 2.500000e-01 : f32
    %49 = vector.broadcast %cst_19 : f32 to vector<16x16xf32>
    %50 = arith.mulf %48, %49 : vector<16x16xf32>
    %51 = arith.addf %50, %44 : vector<16x16xf32>
    %cst_20 = arith.constant dense<0xFF800000> : vector<16xf32>
    %52 = vector.multi_reduction <maximumf>, %51, %cst_20 [1] : vector<16x16xf32> to vector<16xf32>
    %53 = vector.shape_cast %52 : vector<16xf32> to vector<16x1xf32>
    %54 = vector.broadcast %53 : vector<16x1xf32> to vector<16x16xf32>
    %55 = arith.subf %51, %54 : vector<16x16xf32>
    %56 = math.exp %55 : vector<16x16xf32>
    %cst_21 = arith.constant dense<0.000000e+00> : vector<16xf32>
    %57 = vector.multi_reduction <add>, %56, %cst_21 [1] : vector<16x16xf32> to vector<16xf32>
    %58 = vector.shape_cast %57 : vector<16xf32> to vector<16x1xf32>
    %59 = tpu.reciprocal %58 : vector<16x1xf32> -> vector<16x1xf32>
    %60 = vector.broadcast %59 : vector<16x1xf32> to vector<16x16xf32>
    %61 = arith.mulf %56, %60 : vector<16x16xf32>
    %cst_22 = arith.constant dense<0.000000e+00> : vector<16x16xf32>
    %62 = tpu.matmul %61, %47, %cst_22 {dimension_numbers = #tpu.dot_dimension_numbers<[1], [0], [0], [1], [0, 0, 1, 1], [], []>} : vector<16x16xf32>, vector<16x16xf32>, vector<16x16xf32> -> vector<16x16xf32>
    %63 = vector.extract_strided_slice %6 {offsets = [0, 0], sizes = [16, 32], strides = [1, 1]} : vector<32x32xf32> to vector<16x32xf32>
    %cst_23 = arith.constant dense<0.000000e+00> : vector<16x32xf32>
    %64 = tpu.matmul %62, %63, %cst_23 {dimension_numbers = #tpu.dot_dimension_numbers<[1], [0], [0], [1], [0, 0, 1, 1], [], []>} : vector<16x16xf32>, vector<16x32xf32>, vector<16x32xf32> -> vector<16x32xf32>
    %65 = vector.extract_strided_slice %5 {offsets = [0, 16], sizes = [16, 16], strides = [1, 1]} : vector<16x96xf32> to vector<16x16xf32>
    %66 = vector.extract_strided_slice %5 {offsets = [0, 48], sizes = [16, 16], strides = [1, 1]} : vector<16x96xf32> to vector<16x16xf32>
    %67 = vector.extract_strided_slice %5 {offsets = [0, 80], sizes = [16, 16], strides = [1, 1]} : vector<16x96xf32> to vector<16x16xf32>
    %cst_24 = arith.constant dense<0.000000e+00> : vector<16x16xf32>
    %68 = tpu.matmul %65, %66, %cst_24 {dimension_numbers = #tpu.dot_dimension_numbers<[1], [1], [0], [0], [0, 0, 1, 0], [], []>} : vector<16x16xf32>, vector<16x16xf32>, vector<16x16xf32> -> vector<16x16xf32>
    %cst_25 = arith.constant 2.500000e-01 : f32
    %69 = vector.broadcast %cst_25 : f32 to vector<16x16xf32>
    %70 = arith.mulf %68, %69 : vector<16x16xf32>
    %71 = arith.addf %70, %44 : vector<16x16xf32>
    %cst_26 = arith.constant dense<0xFF800000> : vector<16xf32>
    %72 = vector.multi_reduction <maximumf>, %71, %cst_26 [1] : vector<16x16xf32> to vector<16xf32>
    %73 = vector.shape_cast %72 : vector<16xf32> to vector<16x1xf32>
    %74 = vector.broadcast %73 : vector<16x1xf32> to vector<16x16xf32>
    %75 = arith.subf %71, %74 : vector<16x16xf32>
    %76 = math.exp %75 : vector<16x16xf32>
    %cst_27 = arith.constant dense<0.000000e+00> : vector<16xf32>
    %77 = vector.multi_reduction <add>, %76, %cst_27 [1] : vector<16x16xf32> to vector<16xf32>
    %78 = vector.shape_cast %77 : vector<16xf32> to vector<16x1xf32>
    %79 = tpu.reciprocal %78 : vector<16x1xf32> -> vector<16x1xf32>
    %80 = vector.broadcast %79 : vector<16x1xf32> to vector<16x16xf32>
    %81 = arith.mulf %76, %80 : vector<16x16xf32>
    %cst_28 = arith.constant dense<0.000000e+00> : vector<16x16xf32>
    %82 = tpu.matmul %81, %67, %cst_28 {dimension_numbers = #tpu.dot_dimension_numbers<[1], [0], [0], [1], [0, 0, 1, 1], [], []>} : vector<16x16xf32>, vector<16x16xf32>, vector<16x16xf32> -> vector<16x16xf32>
    %83 = vector.extract_strided_slice %6 {offsets = [16, 0], sizes = [16, 32], strides = [1, 1]} : vector<32x32xf32> to vector<16x32xf32>
    %cst_29 = arith.constant dense<0.000000e+00> : vector<16x32xf32>
    %84 = tpu.matmul %82, %83, %cst_29 {dimension_numbers = #tpu.dot_dimension_numbers<[1], [0], [0], [1], [0, 0, 1, 1], [], []>} : vector<16x16xf32>, vector<16x32xf32>, vector<16x32xf32> -> vector<16x32xf32>
    %85 = arith.addf %64, %84 : vector<16x32xf32>
    %c0_30 = arith.constant 0 : index
    %c0_31 = arith.constant 0 : index
    %86 = vector.load %arg5[%c0_30, %c0_31] : memref<1x32xf32, #tpu.memory_space<vmem>>, vector<1x32xf32>
    %87 = vector.broadcast %86 : vector<1x32xf32> to vector<16x32xf32>
    %88 = arith.addf %85, %87 : vector<16x32xf32>
    %89 = arith.addf %88, %0 : vector<16x32xf32>
    %c0_32 = arith.constant 0 : index
    %c0_33 = arith.constant 0 : index
    %90 = vector.load %arg6[%c0_32, %c0_33] : memref<1x32xf32, #tpu.memory_space<vmem>>, vector<1x32xf32>
    %c0_34 = arith.constant 0 : index
    %c0_35 = arith.constant 0 : index
    %91 = vector.load %arg7[%c0_34, %c0_35] : memref<1x32xf32, #tpu.memory_space<vmem>>, vector<1x32xf32>
    %cst_36 = arith.constant dense<0.000000e+00> : vector<16xf32>
    %92 = vector.multi_reduction <add>, %89, %cst_36 [1] : vector<16x32xf32> to vector<16xf32>
    %93 = vector.shape_cast %92 : vector<16xf32> to vector<16x1xf32>
    %cst_37 = arith.constant 3.200000e+01 : f32
    %94 = vector.broadcast %cst_37 : f32 to vector<16x1xf32>
    %95 = arith.divf %93, %94 : vector<16x1xf32>
    %96 = vector.broadcast %95 : vector<16x1xf32> to vector<16x32xf32>
    %97 = arith.subf %89, %96 : vector<16x32xf32>
    %98 = arith.mulf %97, %97 : vector<16x32xf32>
    %cst_38 = arith.constant dense<0.000000e+00> : vector<16xf32>
    %99 = vector.multi_reduction <add>, %98, %cst_38 [1] : vector<16x32xf32> to vector<16xf32>
    %100 = vector.shape_cast %99 : vector<16xf32> to vector<16x1xf32>
    %cst_39 = arith.constant 3.200000e+01 : f32
    %101 = vector.broadcast %cst_39 : f32 to vector<16x1xf32>
    %102 = arith.divf %100, %101 : vector<16x1xf32>
    %cst_40 = arith.constant 9.99999997E-7 : f32
    %103 = vector.broadcast %cst_40 : f32 to vector<16x1xf32>
    %104 = arith.addf %102, %103 : vector<16x1xf32>
    %105 = math.rsqrt %104 : vector<16x1xf32>
    %106 = vector.broadcast %95 : vector<16x1xf32> to vector<16x32xf32>
    %107 = arith.subf %89, %106 : vector<16x32xf32>
    %108 = vector.broadcast %105 : vector<16x1xf32> to vector<16x32xf32>
    %109 = arith.mulf %107, %108 : vector<16x32xf32>
    %110 = vector.broadcast %90 : vector<1x32xf32> to vector<16x32xf32>
    %111 = arith.mulf %109, %110 : vector<16x32xf32>
    %112 = vector.broadcast %91 : vector<1x32xf32> to vector<16x32xf32>
    %113 = arith.addf %111, %112 : vector<16x32xf32>
    %c0_41 = arith.constant 0 : index
    %c0_42 = arith.constant 0 : index
    %114 = vector.load %arg8[%c0_41, %c0_42] : memref<32x64xf32, #tpu.memory_space<vmem>>, vector<32x64xf32>
    %cst_43 = arith.constant dense<0.000000e+00> : vector<16x64xf32>
    %115 = tpu.matmul %113, %114, %cst_43 {dimension_numbers = #tpu.dot_dimension_numbers<[1], [0], [0], [1], [0, 0, 1, 1], [], []>} : vector<16x32xf32>, vector<32x64xf32>, vector<16x64xf32> -> vector<16x64xf32>
    %c0_44 = arith.constant 0 : index
    %c0_45 = arith.constant 0 : index
    %116 = vector.load %arg9[%c0_44, %c0_45] : memref<1x64xf32, #tpu.memory_space<vmem>>, vector<1x64xf32>
    %117 = vector.broadcast %116 : vector<1x64xf32> to vector<16x64xf32>
    %118 = arith.addf %115, %117 : vector<16x64xf32>
    %cst_46 = arith.constant 0.000000e+00 : f32
    %119 = vector.broadcast %cst_46 : f32 to vector<16x64xf32>
    %120 = arith.maximumf %118, %119 : vector<16x64xf32>
    %c0_47 = arith.constant 0 : index
    %c0_48 = arith.constant 0 : index
    %121 = vector.load %arg10[%c0_47, %c0_48] : memref<64x32xf32, #tpu.memory_space<vmem>>, vector<64x32xf32>
    %cst_49 = arith.constant dense<0.000000e+00> : vector<16x32xf32>
    %122 = tpu.matmul %120, %121, %cst_49 {dimension_numbers = #tpu.dot_dimension_numbers<[1], [0], [0], [1], [0, 0, 1, 1], [], []>} : vector<16x64xf32>, vector<64x32xf32>, vector<16x32xf32> -> vector<16x32xf32>
    %c0_50 = arith.constant 0 : index
    %c0_51 = arith.constant 0 : index
    %123 = vector.load %arg11[%c0_50, %c0_51] : memref<1x32xf32, #tpu.memory_space<vmem>>, vector<1x32xf32>
    %124 = vector.broadcast %123 : vector<1x32xf32> to vector<16x32xf32>
    %125 = arith.addf %122, %124 : vector<16x32xf32>
    %126 = arith.addf %113, %125 : vector<16x32xf32>
    %c0_52 = arith.constant 0 : index
    %c0_53 = arith.constant 0 : index
    %127 = vector.load %arg12[%c0_52, %c0_53] : memref<1x32xf32, #tpu.memory_space<vmem>>, vector<1x32xf32>
    %c0_54 = arith.constant 0 : index
    %c0_55 = arith.constant 0 : index
    %128 = vector.load %arg13[%c0_54, %c0_55] : memref<1x32xf32, #tpu.memory_space<vmem>>, vector<1x32xf32>
    %cst_56 = arith.constant dense<0.000000e+00> : vector<16xf32>
    %129 = vector.multi_reduction <add>, %126, %cst_56 [1] : vector<16x32xf32> to vector<16xf32>
    %130 = vector.shape_cast %129 : vector<16xf32> to vector<16x1xf32>
    %cst_57 = arith.constant 3.200000e+01 : f32
    %131 = vector.broadcast %cst_57 : f32 to vector<16x1xf32>
    %132 = arith.divf %130, %131 : vector<16x1xf32>
    %133 = vector.broadcast %132 : vector<16x1xf32> to vector<16x32xf32>
    %134 = arith.subf %126, %133 : vector<16x32xf32>
    %135 = arith.mulf %134, %134 : vector<16x32xf32>
    %cst_58 = arith.constant dense<0.000000e+00> : vector<16xf32>
    %136 = vector.multi_reduction <add>, %135, %cst_58 [1] : vector<16x32xf32> to vector<16xf32>
    %137 = vector.shape_cast %136 : vector<16xf32> to vector<16x1xf32>
    %cst_59 = arith.constant 3.200000e+01 : f32
    %138 = vector.broadcast %cst_59 : f32 to vector<16x1xf32>
    %139 = arith.divf %137, %138 : vector<16x1xf32>
    %cst_60 = arith.constant 9.99999997E-7 : f32
    %140 = vector.broadcast %cst_60 : f32 to vector<16x1xf32>
    %141 = arith.addf %139, %140 : vector<16x1xf32>
    %142 = math.rsqrt %141 : vector<16x1xf32>
    %143 = vector.broadcast %132 : vector<16x1xf32> to vector<16x32xf32>
    %144 = arith.subf %126, %143 : vector<16x32xf32>
    %145 = vector.broadcast %142 : vector<16x1xf32> to vector<16x32xf32>
    %146 = arith.mulf %144, %145 : vector<16x32xf32>
    %147 = vector.broadcast %127 : vector<1x32xf32> to vector<16x32xf32>
    %148 = arith.mulf %146, %147 : vector<16x32xf32>
    %149 = vector.broadcast %128 : vector<1x32xf32> to vector<16x32xf32>
    %150 = arith.addf %148, %149 : vector<16x32xf32>
    %c0_61 = arith.constant 0 : index
    %c0_62 = arith.constant 0 : index
    %151 = vector.load %arg14[%c0_61, %c0_62] : memref<16x32xf32, #tpu.memory_space<vmem>>, vector<16x32xf32>
    tpu.vector_store %arg14[%c0_61, %c0_62], %150 {strides = array<i32>} : memref<16x32xf32, #tpu.memory_space<vmem>>, vector<16x32xf32>,
    return
  }
  func.func @transform_0(%arg0: i32) -> (i32, i32) {
    %c0_i32 = arith.constant 0 : i32
    %c0_i32_0 = arith.constant 0 : i32
    %c0_i32_1 = arith.constant 0 : i32
    return %c0_i32, %c0_i32_0 : i32, i32
  }
  func.func @transform_1(%arg0: i32) -> (i32, i32) {
    %c0_i32 = arith.constant 0 : i32
    %c0_i32_0 = arith.constant 0 : i32
    %c0_i32_1 = arith.constant 0 : i32
    return %c0_i32, %c0_i32_0 : i32, i32
  }
  func.func @transform_2(%arg0: i32) -> (i32, i32) {
    %c0_i32 = arith.constant 0 : i32
    %c0_i32_0 = arith.constant 0 : i32
    %c0_i32_1 = arith.constant 0 : i32
    return %c0_i32, %c0_i32_0 : i32, i32
  }
  func.func @transform_3(%arg0: i32) -> (i32, i32) {
    %c0_i32 = arith.constant 0 : i32
    %c0_i32_0 = arith.constant 0 : i32
    %c0_i32_1 = arith.constant 0 : i32
    return %c0_i32, %c0_i32_0 : i32, i32
  }
  func.func @transform_4(%arg0: i32) -> (i32, i32) {
    %c0_i32 = arith.constant 0 : i32
    %c0_i32_0 = arith.constant 0 : i32
    %c0_i32_1 = arith.constant 0 : i32
    return %c0_i32, %c0_i32_0 : i32, i32
  }
  func.func @transform_5(%arg0: i32) -> (i32, i32) {
    %c0_i32 = arith.constant 0 : i32
    %c0_i32_0 = arith.constant 0 : i32
    %c0_i32_1 = arith.constant 0 : i32
    return %c0_i32, %c0_i32_0 : i32, i32
  }
  func.func @transform_6(%arg0: i32) -> (i32, i32) {
    %c0_i32 = arith.constant 0 : i32
    %c0_i32_0 = arith.constant 0 : i32
    %c0_i32_1 = arith.constant 0 : i32
    return %c0_i32, %c0_i32_0 : i32, i32
  }
  func.func @transform_7(%arg0: i32) -> (i32, i32) {
    %c0_i32 = arith.constant 0 : i32
    %c0_i32_0 = arith.constant 0 : i32
    %c0_i32_1 = arith.constant 0 : i32
    return %c0_i32, %c0_i32_0 : i32, i32
  }
  func.func @transform_8(%arg0: i32) -> (i32, i32) {
    %c0_i32 = arith.constant 0 : i32
    %c0_i32_0 = arith.constant 0 : i32
    %c0_i32_1 = arith.constant 0 : i32
    return %c0_i32, %c0_i32_0 : i32, i32
  }
  func.func @transform_9(%arg0: i32) -> (i32, i32) {
    %c0_i32 = arith.constant 0 : i32
    %c0_i32_0 = arith.constant 0 : i32
    %c0_i32_1 = arith.constant 0 : i32
    return %c0_i32, %c0_i32_0 : i32, i32
  }
  func.func @transform_10(%arg0: i32) -> (i32, i32) {
    %c0_i32 = arith.constant 0 : i32
    %c0_i32_0 = arith.constant 0 : i32
    %c0_i32_1 = arith.constant 0 : i32
    return %c0_i32, %c0_i32_0 : i32, i32
  }
  func.func @transform_11(%arg0: i32) -> (i32, i32) {
    %c0_i32 = arith.constant 0 : i32
    %c0_i32_0 = arith.constant 0 : i32
    %c0_i32_1 = arith.constant 0 : i32
    return %c0_i32, %c0_i32_0 : i32, i32
  }
  func.func @transform_12(%arg0: i32) -> (i32, i32) {
    %c0_i32 = arith.constant 0 : i32
    %c0_i32_0 = arith.constant 0 : i32
    %c0_i32_1 = arith.constant 0 : i32
    return %c0_i32, %c0_i32_0 : i32, i32
  }
  func.func @transform_13(%arg0: i32) -> (i32, i32) {
    %c0_i32 = arith.constant 0 : i32
    %c0_i32_0 = arith.constant 0 : i32
    %c0_i32_1 = arith.constant 0 : i32
    return %c0_i32, %c0_i32_0 : i32, i32
  }
}

</mosaic_0001>

<llo_original>
// kernel: tpu_custom_call.1
$region0: #{tpu_custom_call.1}
  #allocation0 [shape = 'u32[]', space=smem, size = 0x4, offset = 0x4, fixed_abs, tag = 'smem constant byte address 0x4 - core index']
  #allocation1 [shape = 'u32[144,128]{1,0:T(1,128)}', space=vmem, size = 0x12000, scoped, tag = 'internal scratch']
  %s0 = inlined_call_operand.hbm [shape: f32[16,32], index: 0, kind: input, shape index: {}]
  %s1 = inlined_call_operand.vmem [shape: f32[32,96], index: 1, kind: input, shape index: {}]
  %s2 = inlined_call_operand.vmem [shape: f32[1,96], index: 2, kind: input, shape index: {}]
  %s3 = inlined_call_operand.vmem [shape: f32[32,32], index: 3, kind: input, shape index: {}]
  %s4 = inlined_call_operand.vmem [shape: f32[1,32], index: 4, kind: input, shape index: {}]
  %s5 = inlined_call_operand.hbm [shape: f32[1,32], index: 5, kind: input, shape index: {}]
  %s6 = inlined_call_operand.hbm [shape: f32[1,32], index: 6, kind: input, shape index: {}]
  %s7 = inlined_call_operand.vmem [shape: f32[32,64], index: 7, kind: input, shape index: {}]
  %s8 = inlined_call_operand.hbm [shape: f32[1,64], index: 8, kind: input, shape index: {}]
  %s9 = inlined_call_operand.vmem [shape: f32[64,32], index: 9, kind: input, shape index: {}]
  %s10 = inlined_call_operand.vmem [shape: f32[1,32], index: 10, kind: input, shape index: {}]
  %s11 = inlined_call_operand.vmem [shape: f32[1,32], index: 11, kind: input, shape index: {}]
  %s12 = inlined_call_operand.vmem [shape: f32[1,32], index: 12, kind: input, shape index: {}]
  %s13 = inlined_call_operand.hbm [shape: f32[16,32], index: 13, kind: output, shape index: {}]
  %s14 = sld [smem:[#allocation0]]
  $region78: #{tpu_custom_call.1} parent=0
    _
  %s16 = ssub.s32 1, %s14
  %s17 = scalar_select 0, %s16, %s14
  $region1: #{tpu_custom_call.1} parent=0
    #allocation2 [shape = 'u8[8192]{0}', space=vmem, size = 0x2000, scoped, tag = 'input window, operand 0, single buffered']
    #allocation3 [shape = 's32[1]{0}', space=sflag, size = 0x4, scoped, tag = 'scoped memory for tpu_custom_call.1']
    #allocation4 [shape = 's32[1]{0}', space=sflag, size = 0x4, scoped, tag = 'scoped memory for tpu_custom_call.1']
    #allocation5 [shape = 'u8[512]{0}', space=vmem, size = 0x400, scoped, tag = 'input window, operand 5, single buffered']
    #allocation6 [shape = 's32[1]{0}', space=sflag, size = 0x4, scoped, tag = 'scoped memory for tpu_custom_call.1']
    #allocation7 [shape = 'u8[512]{0}', space=vmem, size = 0x400, scoped, tag = 'input window, operand 6, single buffered']
    #allocation8 [shape = 'u8[512]{0}', space=vmem, size = 0x400, scoped, tag = 'input window, operand 8, single buffered']
    #allocation9 [shape = 's32[1]{0}', space=sflag, size = 0x4, scoped, tag = 'scoped memory for tpu_custom_call.1']
    #allocation10 [shape = 'u8[8192]{0}', space=vmem, size = 0x2000, scoped, tag = 'output window, operand 0, single buffered']
    %18 = vsyncpa [#allocation3], 0
    %19 = vsyncpa [#allocation6], 0
    %20 = vsyncpa [#allocation9], 0
    %21 = vsyncpa [#allocation4], 0
    // Predicated region
    $region2: #{tpu_custom_call.1} parent=1 // pred_check
      _
    $region3: #{tpu_custom_call.1} parent=1 // pred_check_branch
      %23 = sbr.rel (0) target = $region5
    $region4: #{tpu_custom_call.1} parent=1 // pred_region
      %s25 = ssub.s32 256, 256
      %26 = vsyncadd [#allocation3], %s25
      %s27 = sshll.u32 [#allocation2], 4
      %s28 = int_to_ptr.vmem [resolvable:$true] %s27
      %33 = dma.hbm_to_vmem [thread:$0]  %s0, 256, %s28, [#allocation3], 128, 128, 8
    $region5: #{tpu_custom_call.1} parent=1 // pred_fallthru
      _
    // Predicated region
    $region6: #{tpu_custom_call.1} parent=1 // pred_check
      _
    $region7: #{tpu_custom_call.1} parent=1 // pred_check_branch
      %35 = sbr.rel (0) target = $region9
    $region8: #{tpu_custom_call.1} parent=1 // pred_region
      _
    $region9: #{tpu_custom_call.1} parent=1 // pred_fallthru
      _
    // Predicated region
    $region10: #{tpu_custom_call.1} parent=1 // pred_check
      _
    $region11: #{tpu_custom_call.1} parent=1 // pred_check_branch
      %37 = sbr.rel (0) target = $region13
    $region12: #{tpu_custom_call.1} parent=1 // pred_region
      _
    $region13: #{tpu_custom_call.1} parent=1 // pred_fallthru
      _
    // Predicated region
    $region14: #{tpu_custom_call.1} parent=1 // pred_check
      _
    $region15: #{tpu_custom_call.1} parent=1 // pred_check_branch
      %39 = sbr.rel (0) target = $region17
    $region16: #{tpu_custom_call.1} parent=1 // pred_region
      _
    $region17: #{tpu_custom_call.1} parent=1 // pred_fallthru
      _
    // Predicated region
    $region18: #{tpu_custom_call.1} parent=1 // pred_check
      _
    $region19: #{tpu_custom_call.1} parent=1 // pred_check_branch
      %41 = sbr.rel (0) target = $region21
    $region20: #{tpu_custom_call.1} parent=1 // pred_region
      _
    $region21: #{tpu_custom_call.1} parent=1 // pred_fallthru
      _
    // Predicated region
    $region22: #{tpu_custom_call.1} parent=1 // pred_check
      _
    $region23: #{tpu_custom_call.1} parent=1 // pred_check_branch
      %43 = sbr.rel (0) target = $region25
    $region24: #{tpu_custom_call.1} parent=1 // pred_region
      %s45 = ssub.s32 16, 16
      %46 = vsyncadd [#allocation6], %s45
      %s48 = sshll.u32 [#allocation5], 4
      %s49 = int_to_ptr.vmem [resolvable:$true] %s48
      %51 = dma.hbm_to_vmem [thread:$0]  %s5, 16, %s49, [#allocation6]
    $region25: #{tpu_custom_call.1} parent=1 // pred_fallthru
      _
    // Predicated region
    $region26: #{tpu_custom_call.1} parent=1 // pred_check
      _
    $region27: #{tpu_custom_call.1} parent=1 // pred_check_branch
      %53 = sbr.rel (0) target = $region29
    $region28: #{tpu_custom_call.1} parent=1 // pred_region
      %s55 = ssub.s32 16, 16
      %56 = vsyncadd [#allocation6], %s55
      %s58 = sshll.u32 [#allocation7], 4
      %s59 = int_to_ptr.vmem [resolvable:$true] %s58
      %61 = dma.hbm_to_vmem [thread:$0]  %s6, 16, %s59, [#allocation6]
    $region29: #{tpu_custom_call.1} parent=1 // pred_fallthru
      _
    // Predicated region
    $region30: #{tpu_custom_call.1} parent=1 // pred_check
      _
    $region31: #{tpu_custom_call.1} parent=1 // pred_check_branch
      %63 = sbr.rel (0) target = $region33
    $region32: #{tpu_custom_call.1} parent=1 // pred_region
      _
    $region33: #{tpu_custom_call.1} parent=1 // pred_fallthru
      _
    // Predicated region
    $region34: #{tpu_custom_call.1} parent=1 // pred_check
      _
    $region35: #{tpu_custom_call.1} parent=1 // pred_check_branch
      %65 = sbr.rel (0) target = $region37
    $region36: #{tpu_custom_call.1} parent=1 // pred_region
      %s67 = ssub.s32 16, 16
      %68 = vsyncadd [#allocation9], %s67
      %s70 = sshll.u32 [#allocation8], 4
      %s71 = int_to_ptr.vmem [resolvable:$true] %s70
      %73 = dma.hbm_to_vmem [thread:$0]  %s8, 16, %s71, [#allocation9]
    $region37: #{tpu_custom_call.1} parent=1 // pred_fallthru
      _
    // Predicated region
    $region38: #{tpu_custom_call.1} parent=1 // pred_check
      _
    $region39: #{tpu_custom_call.1} parent=1 // pred_check_branch
      %75 = sbr.rel (0) target = $region41
    $region40: #{tpu_custom_call.1} parent=1 // pred_region
      _
    $region41: #{tpu_custom_call.1} parent=1 // pred_fallthru
      _
    // Predicated region
    $region42: #{tpu_custom_call.1} parent=1 // pred_check
      _
    $region43: #{tpu_custom_call.1} parent=1 // pred_check_branch
      %77 = sbr.rel (0) target = $region45
    $region44: #{tpu_custom_call.1} parent=1 // pred_region
      _
    $region45: #{tpu_custom_call.1} parent=1 // pred_fallthru
      _
    // Predicated region
    $region46: #{tpu_custom_call.1} parent=1 // pred_check
      _
    $region47: #{tpu_custom_call.1} parent=1 // pred_check_branch
      %79 = sbr.rel (0) target = $region49
    $region48: #{tpu_custom_call.1} parent=1 // pred_region
      _
    $region49: #{tpu_custom_call.1} parent=1 // pred_fallthru
      _
    // Predicated region
    $region50: #{tpu_custom_call.1} parent=1 // pred_check
      _
    $region51: #{tpu_custom_call.1} parent=1 // pred_check_branch
      %81 = sbr.rel (0) target = $region53
    $region52: #{tpu_custom_call.1} parent=1 // pred_region
      _
    $region53: #{tpu_custom_call.1} parent=1 // pred_fallthru
      _
    // Predicated region
    $region54: #{tpu_custom_call.1} parent=1 // pred_check
      _
    $region55: #{tpu_custom_call.1} parent=1 // pred_check_branch
      %83 = sbr.rel (0) target = $region57
    $region56: #{tpu_custom_call.1} parent=1 // pred_region
      %84 = dma.done [#allocation3], 256
    $region57: #{tpu_custom_call.1} parent=1 // pred_fallthru
      _
    // Predicated region
    $region58: #{tpu_custom_call.1} parent=1 // pred_check
      _
    $region59: #{tpu_custom_call.1} parent=1 // pred_check_branch
      %86 = sbr.rel (0) target = $region61
    $region60: #{tpu_custom_call.1} parent=1 // pred_region
      %87 = dma.done [#allocation6], 16
    $region61: #{tpu_custom_call.1} parent=1 // pred_fallthru
      _
    // Predicated region
    $region62: #{tpu_custom_call.1} parent=1 // pred_check
      _
    $region63: #{tpu_custom_call.1} parent=1 // pred_check_branch
      %89 = sbr.rel (0) target = $region65
    $region64: #{tpu_custom_call.1} parent=1 // pred_region
      %90 = dma.done [#allocation6], 16
    $region65: #{tpu_custom_call.1} parent=1 // pred_fallthru
      _
    // Predicated region
    $region66: #{tpu_custom_call.1} parent=1 // pred_check
      _
    $region67: #{tpu_custom_call.1} parent=1 // pred_check_branch
      %92 = sbr.rel (0) target = $region69
    $region68: #{tpu_custom_call.1} parent=1 // pred_region
      %93 = dma.done [#allocation9], 16
    $region69: #{tpu_custom_call.1} parent=1 // pred_fallthru
      _
    %v94 = vld [vmem:[#allocation2] sm:$0xff]
    %v95 = vld [vmem:[#allocation2 + $0x8] sm:$0xff]
    %v96 = vld [vmem:[%s1] sm:$0xff]
    %v97 = vld [vmem:[%s1 + $0x8] sm:$0xff]
    %v98 = vld [vmem:[%s1 + $0x10] sm:$0xff]
    %v99 = vld [vmem:[%s1 + $0x18] sm:$0xff]
    %v100 = vld [vmem:[%s2] sm:$0x1]
    %v102 = vlaneseq
    %v103 = vshrl.u32 %v102, 7
    %v104 = vsub.s32 0, %v103
    %v105 = vrot.slane %v100, %v104
    %vm107 = vcmask 261120
    %v109 = vsel %vm107, %v94, 0
    %v112 = vsel %vm107, %v95, 0
    %114 = vmatprep.subr.mxu0 0.0
    %115 = vmatpush1.msra.mxu0 %v96
    %116 = vmatprep.subr.mxu0 0.0
    %117 = vmatpush1.msra.mxu0 %v97
    %118 = vmatprep.subr.mxu0 0.0
    %119 = vmatpush1.msra.mxu0 %v98
    %120 = vmatprep.subr.mxu0 0.0
    %121 = vmatpush1.msra.mxu0 %v99
    %122 = vmatprep.subr.mxu0 0.0
    %123 = vmatpush1.msra.mxu0 0.0
    %124 = vmatprep.subr.mxu0 0.0
    %125 = vmatpush1.msra.mxu0 0.0
    %126 = vmatprep.subr.mxu0 0.0
    %127 = vmatpush1.msra.mxu0 0.0
    %128 = vmatprep.subr.mxu0 0.0
    %129 = vmatpush1.msra.mxu0 0.0
    %130 = vmatprep.subr.mxu0 0.0
    %131 = vmatpush1.msra.mxu0 0.0
    %132 = vmatprep.subr.mxu0 0.0
    %133 = vmatpush1.msra.mxu0 0.0
    %134 = vmatprep.subr.mxu0 0.0
    %135 = vmatpush1.msra.mxu0 0.0
    %136 = vmatprep.subr.mxu0 0.0
    %137 = vmatpush1.msra.mxu0 0.0
    %138 = vmatprep.subr.mxu0 0.0
    %139 = vmatpush1.msra.mxu0 0.0
    %140 = vmatprep.subr.mxu0 0.0
    %141 = vmatpush1.msra.mxu0 0.0
    %142 = vmatprep.subr.mxu0 0.0
    %143 = vmatpush1.msra.mxu0 0.0
    %144 = vmatprep.subr.mxu0 0.0
    %145 = vmatpush1.msra.mxu0 0.0
    %146 = vmatprep.subr.mxu0 0.0
    %147 = vmatpush1.msra.mxu0 0.0
    %148 = vmatprep.subr.mxu0 0.0
    %149 = vmatpush1.msra.mxu0 0.0
    %150 = vmatprep.subr.mxu0 0.0
    %151 = vmatpush1.msra.mxu0 0.0
    %152 = vmatprep.subr.mxu0 0.0
    %153 = vmatpush1.msra.mxu0 0.0
    %154 = vmatprep.subr.mxu0 0.0
    %155 = vmatpush1.msra.mxu0 0.0
    %156 = vmatprep.subr.mxu0 0.0
    %157 = vmatpush1.msra.mxu0 0.0
    %158 = vmatprep.subr.mxu0 0.0
    %159 = vmatpush1.msra.mxu0 0.0
    %160 = vmatprep.subr.mxu0 0.0
    %161 = vmatpush1.msra.mxu0 0.0
    %162 = vmatprep.subr.mxu0 0.0
    %163 = vmatpush1.msra.mxu0 0.0
    %164 = vmatprep.subr.mxu0 0.0
    %165 = vmatpush1.msra.mxu0 0.0
    %166 = vmatprep.subr.mxu0 0.0
    %167 = vmatpush1.msra.mxu0 0.0
    %168 = vmatprep.subr.mxu0 0.0
    %169 = vmatpush1.msra.mxu0 0.0
    %170 = vmatprep.subr.mxu0 0.0
    %171 = vmatpush1.msra.mxu0 0.0
    %172 = vmatprep.subr.mxu0 0.0
    %173 = vmatpush1.msra.mxu0 0.0
    %174 = vmatprep.subr.mxu0 0.0
    %175 = vmatpush1.msra.mxu0 0.0
    %176 = vmatprep.subr.mxu0 0.0
    %177 = vmatpush1.msra.mxu0 0.0
    %178 = vmatprep.mubr.f32.mxu0 0.0
    %179 = vmatmul.mubr.f32.gmra.mrb[0].mxu0 %v109
    %v180 = vpop.f32.mrb[0].mxu0
    %v181 = vadd.f32 %v105, %v180
    %v182 = vpop.f32.mrb[0].mxu0
    %183 = vmatprep.mubr.f32.mxu0 0.0
    %184 = vmatmul.mubr.f32.gmra.mrb[0].mxu0 %v112
    %v185 = vpop.f32.mrb[0].mxu0
    %v186 = vadd.f32 %v105, %v185
    %v187 = vpop.f32.mrb[0].mxu0
    %188 = vdwg.mxu0
    %v189 = vld [vmem:[%s3] sm:$0xff]
    %v190 = vld [vmem:[%s3 + $0x8] sm:$0xff]
    %v191 = vld [vmem:[%s3 + $0x10] sm:$0xff]
    %v192 = vld [vmem:[%s3 + $0x18] sm:$0xff]
    %v193 = vlaneseq
    %v194 = vshrl.u32 %v193, 7
    %v195 = vadd.s32 %v194, 8
    %vm196 = vcmp.lt.s32.totalorder %v194, 0
    %v197 = vsub.s32 0, %v194
    %v198 = vsel %vm196, %v197, %v194
    %v199 = vshrl.u32 %v198, 1
    %v200 = vand.u32 %v198, 1
    %v201 = vsub.s32 0, %v200
    %v202 = vsel %vm196, %v201, %v200
    %vm203 = vcmp.lt.s32.totalorder %v195, 0
    %v204 = vsub.s32 0, %v195
    %v205 = vsel %vm203, %v204, %v195
    %v206 = vshrl.u32 %v205, 1
    %v207 = vand.u32 %v205, 1
    %v208 = vsub.s32 0, %v207
    %v209 = vsel %vm203, %v208, %v207
    %vm210 = vcmp.ne.s32.totalorder %v202, 0
    %vm211 = vcmp.ne.s32.totalorder %v209, 0
    %vm212 = vcmp.lt.s32.totalorder %v202, 0
    %vm213 = vcmp.lt.s32.totalorder %v209, 0
    %vm214 = vmand %vm212, %vm210
    %vm215 = vmand %vm213, %vm211
    %v216 = vadd.s32 %v202, 2
    %v217 = vadd.s32 %v209, 2
    %v218 = vsel %vm214, %v216, %v202
    %v219 = vsel %vm215, %v217, %v209
    %v220 = vlaneseq
    %v221 = vand.u32 %v220, 127
    %vm222 = vcmp.lt.s32.totalorder %v221, 0
    %v223 = vsub.s32 0, %v221
    %v224 = vsel %vm222, %v223, %v221
    %v225 = vshrl.u32 %v224, 1
    %v226 = vand.u32 %v224, 1
    %v227 = vsub.s32 0, %v226
    %v228 = vsel %vm222, %v227, %v226
    %vm229 = vcmp.ne.s32.totalorder %v228, 0
    %vm230 = vcmp.lt.s32.totalorder %v228, 0
    %vm231 = vmand %vm230, %vm229
    %v232 = vadd.s32 %v228, 2
    %v233 = vsel %vm231, %v232, %v228
    %vm234 = vcmp.eq.s32.totalorder %v218, %v233
    %vm235 = vcmp.eq.s32.totalorder %v219, %v233
    %v236 = vsel %vm234, 0.0, -1e+30
    %v237 = vsel %vm235, 0.0, -1e+30
    %240 = vrot.lane.b32.xlu0 %v181, 96
    %v241 = vpop.permute.xlu0 %240
    %242 = vrot.lane.b32.xlu0 %v186, 96
    %v243 = vpop.permute.xlu0 %242
    %vm244 = vcmask 130048
    %v245 = vsel %vm244, %v181, 0
    %v247 = vsel %vm244, %v186, 0
    %v249 = vsel %vm244, %v241, 0
    %v251 = vsel %vm244, %v243, 0
    %253 = vmatprep.subr.mxu0 0.0
    %254 = vmatpush1.xpose.msra.mxu0 %v249
    %255 = vmatprep.subr.mxu0 0.0
    %256 = vmatpush1.xpose.msra.mxu0 %v251
    %257 = vmatprep.subr.mxu0 0.0
    %258 = vmatpush1.xpose.msra.mxu0 0.0
    %259 = vmatprep.subr.mxu0 0.0
    %260 = vmatpush1.xpose.msra.mxu0 0.0
    %261 = vmatprep.subr.mxu0 0.0
    %262 = vmatpush1.xpose.msra.mxu0 0.0
    %263 = vmatprep.subr.mxu0 0.0
    %264 = vmatpush1.xpose.msra.mxu0 0.0
    %265 = vmatprep.subr.mxu0 0.0
    %266 = vmatpush1.xpose.msra.mxu0 0.0
    %267 = vmatprep.subr.mxu0 0.0
    %268 = vmatpush1.xpose.msra.mxu0 0.0
    %269 = vmatprep.subr.mxu0 0.0
    %270 = vmatpush1.xpose.msra.mxu0 0.0
    %271 = vmatprep.subr.mxu0 0.0
    %272 = vmatpush1.xpose.msra.mxu0 0.0
    %273 = vmatprep.subr.mxu0 0.0
    %274 = vmatpush1.xpose.msra.mxu0 0.0
    %275 = vmatprep.subr.mxu0 0.0
    %276 = vmatpush1.xpose.msra.mxu0 0.0
    %277 = vmatprep.subr.mxu0 0.0
    %278 = vmatpush1.xpose.msra.mxu0 0.0
    %279 = vmatprep.subr.mxu0 0.0
    %280 = vmatpush1.xpose.msra.mxu0 0.0
    %281 = vmatprep.subr.mxu0 0.0
    %282 = vmatpush1.xpose.msra.mxu0 0.0
    %283 = vmatprep.subr.mxu0 0.0
    %284 = vmatpush1.xpose.msra.mxu0 0.0
    %285 = vmatprep.subr.mxu0 0.0
    %286 = vmatpush1.xpose.msra.mxu0 0.0
    %287 = vmatprep.subr.mxu0 0.0
    %288 = vmatpush1.xpose.msra.mxu0 0.0
    %289 = vmatprep.subr.mxu0 0.0
    %290 = vmatpush1.xpose.msra.mxu0 0.0
    %291 = vmatprep.subr.mxu0 0.0
    %292 = vmatpush1.xpose.msra.mxu0 0.0
    %293 = vmatprep.subr.mxu0 0.0
    %294 = vmatpush1.xpose.msra.mxu0 0.0
    %295 = vmatprep.subr.mxu0 0.0
    %296 = vmatpush1.xpose.msra.mxu0 0.0
    %297 = vmatprep.subr.mxu0 0.0
    %298 = vmatpush1.xpose.msra.mxu0 0.0
    %299 = vmatprep.subr.mxu0 0.0
    %300 = vmatpush1.xpose.msra.mxu0 0.0
    %301 = vmatprep.subr.mxu0 0.0
    %302 = vmatpush1.xpose.msra.mxu0 0.0
    %303 = vmatprep.subr.mxu0 0.0
    %304 = vmatpush1.xpose.msra.mxu0 0.0
    %305 = vmatprep.subr.mxu0 0.0
    %306 = vmatpush1.xpose.msra.mxu0 0.0
    %307 = vmatprep.subr.mxu0 0.0
    %308 = vmatpush1.xpose.msra.mxu0 0.0
    %309 = vmatprep.subr.mxu0 0.0
    %310 = vmatpush1.xpose.msra.mxu0 0.0
    %311 = vmatprep.subr.mxu0 0.0
    %312 = vmatpush1.xpose.msra.mxu0 0.0
    %313 = vmatprep.subr.mxu0 0.0
    %314 = vmatpush1.xpose.msra.mxu0 0.0
    %315 = vmatprep.subr.mxu0 0.0
    %316 = vmatpush1.xpose.msra.mxu0 0.0
    %317 = vmatprep.mubr.f32.mxu0 0.0
    %318 = vmatmul.mubr.f32.gmra.mrb[0].mxu0 %v245
    %v319 = vpop.f32.mrb[0].mxu0
    %v320 = vadd.f32 0.0, %v319
    %v321 = vpop.f32.mrb[0].mxu0
    %322 = vmatprep.mubr.f32.mxu0 0.0
    %323 = vmatmul.mubr.f32.gmra.mrb[0].mxu0 %v247
    %v324 = vpop.f32.mrb[0].mxu0
    %v325 = vadd.f32 0.0, %v324
    %v326 = vpop.f32.mrb[0].mxu0
    %327 = vdwg.mxu0
    %v328 = vmul.f32 %v320, 0.25
    %v329 = vmul.f32 %v325, 0.25
    %v330 = vadd.f32 %v328, %v236
    %v331 = vadd.f32 %v329, %v237
    %v332 = vsel %vm244, %v330, -inf
    %333 = vmax.xlane.f32.xlu0 %v332
    %v334 = vpop.xlane.xlu0 %333
    %v335 = vsel %vm244, %v331, -inf
    %336 = vmax.xlane.f32.xlu0 %v335
    %v337 = vpop.xlane.xlu0 %336
    %v338 = vsub.f32 %v330, %v334
    %v339 = vsub.f32 %v331, %v337
    %v340 = vmul.f32 %v338, 1.442695
    %v341 = vpow.pop %v340
    %v342 = vmul.f32 %v339, 1.442695
    %v343 = vpow.pop %v342
    %v344 = vsel %vm244, %v341, 0.0
    %345 = vadd.xlane.f32.xlu0 %v344
    %v346 = vpop.xlane.xlu0 %345
    %v347 = vsel %vm244, %v343, 0.0
    %348 = vadd.xlane.f32.xlu0 %v347
    %v349 = vpop.xlane.xlu0 %348
    %v350 = vrcp.pop %v346
    %v351 = vrcp.pop %v349
    %v352 = vmul.f32 %v341, %v350
    %v353 = vmul.f32 %v343, %v351
    %354 = vrot.lane.b32.xlu0 %v181, 64
    %v355 = vpop.permute.xlu0 %354
    %356 = vrot.lane.b32.xlu0 %v186, 64
    %v357 = vpop.permute.xlu0 %356
    %v361 = vsel %vm244, %v352, 0
    %v364 = vsel %vm244, %v353, 0
    %366 = vmatprep.subr.mxu0 0.0
    %367 = vmatpush1.msra.mxu0 %v355
    %368 = vmatprep.subr.mxu0 0.0
    %369 = vmatpush1.msra.mxu0 %v357
    %370 = vmatprep.subr.mxu0 0.0
    %371 = vmatpush1.msra.mxu0 0.0
    %372 = vmatprep.subr.mxu0 0.0
    %373 = vmatpush1.msra.mxu0 0.0
    %374 = vmatprep.subr.mxu0 0.0
    %375 = vmatpush1.msra.mxu0 0.0
    %376 = vmatprep.subr.mxu0 0.0
    %377 = vmatpush1.msra.mxu0 0.0
    %378 = vmatprep.subr.mxu0 0.0
    %379 = vmatpush1.msra.mxu0 0.0
    %380 = vmatprep.subr.mxu0 0.0
    %381 = vmatpush1.msra.mxu0 0.0
    %382 = vmatprep.subr.mxu0 0.0
    %383 = vmatpush1.msra.mxu0 0.0
    %384 = vmatprep.subr.mxu0 0.0
    %385 = vmatpush1.msra.mxu0 0.0
    %386 = vmatprep.subr.mxu0 0.0
    %387 = vmatpush1.msra.mxu0 0.0
    %388 = vmatprep.subr.mxu0 0.0
    %389 = vmatpush1.msra.mxu0 0.0
    %390 = vmatprep.subr.mxu0 0.0
    %391 = vmatpush1.msra.mxu0 0.0
    %392 = vmatprep.subr.mxu0 0.0
    %393 = vmatpush1.msra.mxu0 0.0
    %394 = vmatprep.subr.mxu0 0.0
    %395 = vmatpush1.msra.mxu0 0.0
    %396 = vmatprep.subr.mxu0 0.0
    %397 = vmatpush1.msra.mxu0 0.0
    %398 = vmatprep.subr.mxu0 0.0
    %399 = vmatpush1.msra.mxu0 0.0
    %400 = vmatprep.subr.mxu0 0.0
    %401 = vmatpush1.msra.mxu0 0.0
    %402 = vmatprep.subr.mxu0 0.0
    %403 = vmatpush1.msra.mxu0 0.0
    %404 = vmatprep.subr.mxu0 0.0
    %405 = vmatpush1.msra.mxu0 0.0
    %406 = vmatprep.subr.mxu0 0.0
    %407 = vmatpush1.msra.mxu0 0.0
    %408 = vmatprep.subr.mxu0 0.0
    %409 = vmatpush1.msra.mxu0 0.0
    %410 = vmatprep.subr.mxu0 0.0
    %411 = vmatpush1.msra.mxu0 0.0
    %412 = vmatprep.subr.mxu0 0.0
    %413 = vmatpush1.msra.mxu0 0.0
    %414 = vmatprep.subr.mxu0 0.0
    %415 = vmatpush1.msra.mxu0 0.0
    %416 = vmatprep.subr.mxu0 0.0
    %417 = vmatpush1.msra.mxu0 0.0
    %418 = vmatprep.subr.mxu0 0.0
    %419 = vmatpush1.msra.mxu0 0.0
    %420 = vmatprep.subr.mxu0 0.0
    %421 = vmatpush1.msra.mxu0 0.0
    %422 = vmatprep.subr.mxu0 0.0
    %423 = vmatpush1.msra.mxu0 0.0
    %424 = vmatprep.subr.mxu0 0.0
    %425 = vmatpush1.msra.mxu0 0.0
    %426 = vmatprep.subr.mxu0 0.0
    %427 = vmatpush1.msra.mxu0 0.0
    %428 = vmatprep.subr.mxu0 0.0
    %429 = vmatpush1.msra.mxu0 0.0
    %430 = vmatprep.mubr.f32.mxu0 0.0
    %431 = vmatmul.mubr.f32.gmra.mrb[0].mxu0 %v361
    %v432 = vpop.f32.mrb[0].mxu0
    %v433 = vadd.f32 0.0, %v432
    %v434 = vpop.f32.mrb[0].mxu0
    %435 = vmatprep.mubr.f32.mxu0 0.0
    %436 = vmatmul.mubr.f32.gmra.mrb[0].mxu0 %v364
    %v437 = vpop.f32.mrb[0].mxu0
    %v438 = vadd.f32 0.0, %v437
    %v439 = vpop.f32.mrb[0].mxu0
    %440 = vdwg.mxu0
    %441 = vrot.lane.b32.xlu0 %v181, 112
    %v442 = vpop.permute.xlu0 %441
    %443 = vrot.lane.b32.xlu0 %v186, 112
    %v444 = vpop.permute.xlu0 %443
    %445 = vrot.lane.b32.xlu0 %v181, 80
    %v446 = vpop.permute.xlu0 %445
    %447 = vrot.lane.b32.xlu0 %v186, 80
    %v448 = vpop.permute.xlu0 %447
    %v449 = vsel %vm244, %v442, 0
    %v451 = vsel %vm244, %v444, 0
    %v453 = vsel %vm244, %v446, 0
    %v455 = vsel %vm244, %v448, 0
    %457 = vmatprep.subr.mxu0 0.0
    %458 = vmatpush1.xpose.msra.mxu0 %v453
    %459 = vmatprep.subr.mxu0 0.0
    %460 = vmatpush1.xpose.msra.mxu0 %v455
    %461 = vmatprep.subr.mxu0 0.0
    %462 = vmatpush1.xpose.msra.mxu0 0.0
    %463 = vmatprep.subr.mxu0 0.0
    %464 = vmatpush1.xpose.msra.mxu0 0.0
    %465 = vmatprep.subr.mxu0 0.0
    %466 = vmatpush1.xpose.msra.mxu0 0.0
    %467 = vmatprep.subr.mxu0 0.0
    %468 = vmatpush1.xpose.msra.mxu0 0.0
    %469 = vmatprep.subr.mxu0 0.0
    %470 = vmatpush1.xpose.msra.mxu0 0.0
    %471 = vmatprep.subr.mxu0 0.0
    %472 = vmatpush1.xpose.msra.mxu0 0.0
    %473 = vmatprep.subr.mxu0 0.0
    %474 = vmatpush1.xpose.msra.mxu0 0.0
    %475 = vmatprep.subr.mxu0 0.0
    %476 = vmatpush1.xpose.msra.mxu0 0.0
    %477 = vmatprep.subr.mxu0 0.0
    %478 = vmatpush1.xpose.msra.mxu0 0.0
    %479 = vmatprep.subr.mxu0 0.0
    %480 = vmatpush1.xpose.msra.mxu0 0.0
    %481 = vmatprep.subr.mxu0 0.0
    %482 = vmatpush1.xpose.msra.mxu0 0.0
    %483 = vmatprep.subr.mxu0 0.0
    %484 = vmatpush1.xpose.msra.mxu0 0.0
    %485 = vmatprep.subr.mxu0 0.0
    %486 = vmatpush1.xpose.msra.mxu0 0.0
    %487 = vmatprep.subr.mxu0 0.0
    %488 = vmatpush1.xpose.msra.mxu0 0.0
    %489 = vmatprep.subr.mxu0 0.0
    %490 = vmatpush1.xpose.msra.mxu0 0.0
    %491 = vmatprep.subr.mxu0 0.0
    %492 = vmatpush1.xpose.msra.mxu0 0.0
    %493 = vmatprep.subr.mxu0 0.0
    %494 = vmatpush1.xpose.msra.mxu0 0.0
    %495 = vmatprep.subr.mxu0 0.0
    %496 = vmatpush1.xpose.msra.mxu0 0.0
    %497 = vmatprep.subr.mxu0 0.0
    %498 = vmatpush1.xpose.msra.mxu0 0.0
    %499 = vmatprep.subr.mxu0 0.0
    %500 = vmatpush1.xpose.msra.mxu0 0.0
    %501 = vmatprep.subr.mxu0 0.0
    %502 = vmatpush1.xpose.msra.mxu0 0.0
    %503 = vmatprep.subr.mxu0 0.0
    %504 = vmatpush1.xpose.msra.mxu0 0.0
    %505 = vmatprep.subr.mxu0 0.0
    %506 = vmatpush1.xpose.msra.mxu0 0.0
    %507 = vmatprep.subr.mxu0 0.0
    %508 = vmatpush1.xpose.msra.mxu0 0.0
    %509 = vmatprep.subr.mxu0 0.0
    %510 = vmatpush1.xpose.msra.mxu0 0.0
    %511 = vmatprep.subr.mxu0 0.0
    %512 = vmatpush1.xpose.msra.mxu0 0.0
    %513 = vmatprep.subr.mxu0 0.0
    %514 = vmatpush1.xpose.msra.mxu0 0.0
    %515 = vmatprep.subr.mxu0 0.0
    %516 = vmatpush1.xpose.msra.mxu0 0.0
    %517 = vmatprep.subr.mxu0 0.0
    %518 = vmatpush1.xpose.msra.mxu0 0.0
    %519 = vmatprep.subr.mxu0 0.0
    %520 = vmatpush1.xpose.msra.mxu0 0.0
    %521 = vmatprep.mubr.f32.mxu0 0.0
    %522 = vmatmul.mubr.f32.gmra.mrb[0].mxu0 %v449
    %v523 = vpop.f32.mrb[0].mxu0
    %v524 = vadd.f32 0.0, %v523
    %v525 = vpop.f32.mrb[0].mxu0
    %526 = vmatprep.mubr.f32.mxu0 0.0
    %527 = vmatmul.mubr.f32.gmra.mrb[0].mxu0 %v451
    %v528 = vpop.f32.mrb[0].mxu0
    %v529 = vadd.f32 0.0, %v528
    %v530 = vpop.f32.mrb[0].mxu0
    %531 = vdwg.mxu0
    %v532 = vmul.f32 %v524, 0.25
    %v533 = vmul.f32 %v529, 0.25
    %v534 = vadd.f32 %v532, %v236
    %v535 = vadd.f32 %v533, %v237
    %v536 = vsel %vm244, %v534, -inf
    %537 = vmax.xlane.f32.xlu0 %v536
    %v538 = vpop.xlane.xlu0 %537
    %v539 = vsel %vm244, %v535, -inf
    %540 = vmax.xlane.f32.xlu0 %v539
    %v541 = vpop.xlane.xlu0 %540
    %v542 = vsub.f32 %v534, %v538
    %v543 = vsub.f32 %v535, %v541
    %v544 = vmul.f32 %v542, 1.442695
    %v545 = vpow.pop %v544
    %v546 = vmul.f32 %v543, 1.442695
    %v547 = vpow.pop %v546
    %v548 = vsel %vm244, %v545, 0.0
    %549 = vadd.xlane.f32.xlu0 %v548
    %v550 = vpop.xlane.xlu0 %549
    %v551 = vsel %vm244, %v547, 0.0
    %552 = vadd.xlane.f32.xlu0 %v551
    %v553 = vpop.xlane.xlu0 %552
    %v554 = vrcp.pop %v550
    %v555 = vrcp.pop %v553
    %v556 = vmul.f32 %v545, %v554
    %v557 = vmul.f32 %v547, %v555
    %558 = vrot.lane.b32.xlu0 %v181, 48
    %v559 = vpop.permute.xlu0 %558
    %560 = vrot.lane.b32.xlu0 %v186, 48
    %v561 = vpop.permute.xlu0 %560
    %v565 = vsel %vm244, %v556, 0
    %v568 = vsel %vm244, %v557, 0
    %570 = vmatprep.subr.mxu0 0.0
    %571 = vmatpush1.msra.mxu0 %v559
    %572 = vmatprep.subr.mxu0 0.0
    %573 = vmatpush1.msra.mxu0 %v561
    %574 = vmatprep.subr.mxu0 0.0
    %575 = vmatpush1.msra.mxu0 0.0
    %576 = vmatprep.subr.mxu0 0.0
    %577 = vmatpush1.msra.mxu0 0.0
    %578 = vmatprep.subr.mxu0 0.0
    %579 = vmatpush1.msra.mxu0 0.0
    %580 = vmatprep.subr.mxu0 0.0
    %581 = vmatpush1.msra.mxu0 0.0
    %582 = vmatprep.subr.mxu0 0.0
    %583 = vmatpush1.msra.mxu0 0.0
    %584 = vmatprep.subr.mxu0 0.0
    %585 = vmatpush1.msra.mxu0 0.0
    %586 = vmatprep.subr.mxu0 0.0
    %587 = vmatpush1.msra.mxu0 0.0
    %588 = vmatprep.subr.mxu0 0.0
    %589 = vmatpush1.msra.mxu0 0.0
    %590 = vmatprep.subr.mxu0 0.0
    %591 = vmatpush1.msra.mxu0 0.0
    %592 = vmatprep.subr.mxu0 0.0
    %593 = vmatpush1.msra.mxu0 0.0
    %594 = vmatprep.subr.mxu0 0.0
    %595 = vmatpush1.msra.mxu0 0.0
    %596 = vmatprep.subr.mxu0 0.0
    %597 = vmatpush1.msra.mxu0 0.0
    %598 = vmatprep.subr.mxu0 0.0
    %599 = vmatpush1.msra.mxu0 0.0
    %600 = vmatprep.subr.mxu0 0.0
    %601 = vmatpush1.msra.mxu0 0.0
    %602 = vmatprep.subr.mxu0 0.0
    %603 = vmatpush1.msra.mxu0 0.0
    %604 = vmatprep.subr.mxu0 0.0
    %605 = vmatpush1.msra.mxu0 0.0
    %606 = vmatprep.subr.mxu0 0.0
    %607 = vmatpush1.msra.mxu0 0.0
    %608 = vmatprep.subr.mxu0 0.0
    %609 = vmatpush1.msra.mxu0 0.0
    %610 = vmatprep.subr.mxu0 0.0
    %611 = vmatpush1.msra.mxu0 0.0
    %612 = vmatprep.subr.mxu0 0.0
    %613 = vmatpush1.msra.mxu0 0.0
    %614 = vmatprep.subr.mxu0 0.0
    %615 = vmatpush1.msra.mxu0 0.0
    %616 = vmatprep.subr.mxu0 0.0
    %617 = vmatpush1.msra.mxu0 0.0
    %618 = vmatprep.subr.mxu0 0.0
    %619 = vmatpush1.msra.mxu0 0.0
    %620 = vmatprep.subr.mxu0 0.0
    %621 = vmatpush1.msra.mxu0 0.0
    %622 = vmatprep.subr.mxu0 0.0
    %623 = vmatpush1.msra.mxu0 0.0
    %624 = vmatprep.subr.mxu0 0.0
    %625 = vmatpush1.msra.mxu0 0.0
    %626 = vmatprep.subr.mxu0 0.0
    %627 = vmatpush1.msra.mxu0 0.0
    %628 = vmatprep.subr.mxu0 0.0
    %629 = vmatpush1.msra.mxu0 0.0
    %630 = vmatprep.subr.mxu0 0.0
    %631 = vmatpush1.msra.mxu0 0.0
    %632 = vmatprep.subr.mxu0 0.0
    %633 = vmatpush1.msra.mxu0 0.0
    %634 = vmatprep.mubr.f32.mxu0 0.0
    %635 = vmatmul.mubr.f32.gmra.mrb[0].mxu0 %v565
    %v636 = vpop.f32.mrb[0].mxu0
    %v637 = vadd.f32 0.0, %v636
    %v638 = vpop.f32.mrb[0].mxu0
    %639 = vmatprep.mubr.f32.mxu0 0.0
    %640 = vmatmul.mubr.f32.gmra.mrb[0].mxu0 %v568
    %v641 = vpop.f32.mrb[0].mxu0
    %v642 = vadd.f32 0.0, %v641
    %v643 = vpop.f32.mrb[0].mxu0
    %644 = vdwg.mxu0
    %v646 = vsel %vm244, %v637, 0
    %v649 = vsel %vm244, %v642, 0
    %651 = vmatprep.subr.mxu0 0.0
    %652 = vmatpush1.msra.mxu0 %v191
    %653 = vmatprep.subr.mxu0 0.0
    %654 = vmatpush1.msra.mxu0 %v192
    %655 = vmatprep.subr.mxu0 0.0
    %656 = vmatpush1.msra.mxu0 0.0
    %657 = vmatprep.subr.mxu0 0.0
    %658 = vmatpush1.msra.mxu0 0.0
    %659 = vmatprep.subr.mxu0 0.0
    %660 = vmatpush1.msra.mxu0 0.0
    %661 = vmatprep.subr.mxu0 0.0
    %662 = vmatpush1.msra.mxu0 0.0
    %663 = vmatprep.subr.mxu0 0.0
    %664 = vmatpush1.msra.mxu0 0.0
    %665 = vmatprep.subr.mxu0 0.0
    %666 = vmatpush1.msra.mxu0 0.0
    %667 = vmatprep.subr.mxu0 0.0
    %668 = vmatpush1.msra.mxu0 0.0
    %669 = vmatprep.subr.mxu0 0.0
    %670 = vmatpush1.msra.mxu0 0.0
    %671 = vmatprep.subr.mxu0 0.0
    %672 = vmatpush1.msra.mxu0 0.0
    %673 = vmatprep.subr.mxu0 0.0
    %674 = vmatpush1.msra.mxu0 0.0
    %675 = vmatprep.subr.mxu0 0.0
    %676 = vmatpush1.msra.mxu0 0.0
    %677 = vmatprep.subr.mxu0 0.0
    %678 = vmatpush1.msra.mxu0 0.0
    %679 = vmatprep.subr.mxu0 0.0
    %680 = vmatpush1.msra.mxu0 0.0
    %681 = vmatprep.subr.mxu0 0.0
    %682 = vmatpush1.msra.mxu0 0.0
    %683 = vmatprep.subr.mxu0 0.0
    %684 = vmatpush1.msra.mxu0 0.0
    %685 = vmatprep.subr.mxu0 0.0
    %686 = vmatpush1.msra.mxu0 0.0
    %687 = vmatprep.subr.mxu0 0.0
    %688 = vmatpush1.msra.mxu0 0.0
    %689 = vmatprep.subr.mxu0 0.0
    %690 = vmatpush1.msra.mxu0 0.0
    %691 = vmatprep.subr.mxu0 0.0
    %692 = vmatpush1.msra.mxu0 0.0
    %693 = vmatprep.subr.mxu0 0.0
    %694 = vmatpush1.msra.mxu0 0.0
    %695 = vmatprep.subr.mxu0 0.0
    %696 = vmatpush1.msra.mxu0 0.0
    %697 = vmatprep.subr.mxu0 0.0
    %698 = vmatpush1.msra.mxu0 0.0
    %699 = vmatprep.subr.mxu0 0.0
    %700 = vmatpush1.msra.mxu0 0.0
    %701 = vmatprep.subr.mxu0 0.0
    %702 = vmatpush1.msra.mxu0 0.0
    %703 = vmatprep.subr.mxu0 0.0
    %704 = vmatpush1.msra.mxu0 0.0
    %705 = vmatprep.subr.mxu0 0.0
    %706 = vmatpush1.msra.mxu0 0.0
    %707 = vmatprep.subr.mxu0 0.0
    %708 = vmatpush1.msra.mxu0 0.0
    %709 = vmatprep.subr.mxu0 0.0
    %710 = vmatpush1.msra.mxu0 0.0
    %711 = vmatprep.subr.mxu0 0.0
    %712 = vmatpush1.msra.mxu0 0.0
    %713 = vmatprep.subr.mxu0 0.0
    %714 = vmatpush1.msra.mxu0 0.0
    %715 = vmatprep.mubr.f32.mxu0 0.0
    %716 = vmatmul.mubr.f32.gmra.mrb[0].mxu0 %v646
    %v717 = vpop.f32.mrb[0].mxu0
    %v718 = vadd.f32 0.0, %v717
    %v719 = vpop.f32.mrb[0].mxu0
    %720 = vmatprep.mubr.f32.mxu0 0.0
    %721 = vmatmul.mubr.f32.gmra.mrb[0].mxu0 %v649
    %v722 = vpop.f32.mrb[0].mxu0
    %v723 = vadd.f32 0.0, %v722
    %v724 = vpop.f32.mrb[0].mxu0
    %725 = vdwg.mxu0
    %v727 = vsel %vm244, %v433, 0
    %v730 = vsel %vm244, %v438, 0
    %732 = vmatprep.subr.mxu0 0.0
    %733 = vmatpush1.msra.mxu0 %v189
    %734 = vmatprep.subr.mxu0 0.0
    %735 = vmatpush1.msra.mxu0 %v190
    %736 = vmatprep.subr.mxu0 0.0
    %737 = vmatpush1.msra.mxu0 0.0
    %738 = vmatprep.subr.mxu0 0.0
    %739 = vmatpush1.msra.mxu0 0.0
    %740 = vmatprep.subr.mxu0 0.0
    %741 = vmatpush1.msra.mxu0 0.0
    %742 = vmatprep.subr.mxu0 0.0
    %743 = vmatpush1.msra.mxu0 0.0
    %744 = vmatprep.subr.mxu0 0.0
    %745 = vmatpush1.msra.mxu0 0.0
    %746 = vmatprep.subr.mxu0 0.0
    %747 = vmatpush1.msra.mxu0 0.0
    %748 = vmatprep.subr.mxu0 0.0
    %749 = vmatpush1.msra.mxu0 0.0
    %750 = vmatprep.subr.mxu0 0.0
    %751 = vmatpush1.msra.mxu0 0.0
    %752 = vmatprep.subr.mxu0 0.0
    %753 = vmatpush1.msra.mxu0 0.0
    %754 = vmatprep.subr.mxu0 0.0
    %755 = vmatpush1.msra.mxu0 0.0
    %756 = vmatprep.subr.mxu0 0.0
    %757 = vmatpush1.msra.mxu0 0.0
    %758 = vmatprep.subr.mxu0 0.0
    %759 = vmatpush1.msra.mxu0 0.0
    %760 = vmatprep.subr.mxu0 0.0
    %761 = vmatpush1.msra.mxu0 0.0
    %762 = vmatprep.subr.mxu0 0.0
    %763 = vmatpush1.msra.mxu0 0.0
    %764 = vmatprep.subr.mxu0 0.0
    %765 = vmatpush1.msra.mxu0 0.0
    %766 = vmatprep.subr.mxu0 0.0
    %767 = vmatpush1.msra.mxu0 0.0
    %768 = vmatprep.subr.mxu0 0.0
    %769 = vmatpush1.msra.mxu0 0.0
    %770 = vmatprep.subr.mxu0 0.0
    %771 = vmatpush1.msra.mxu0 0.0
    %772 = vmatprep.subr.mxu0 0.0
    %773 = vmatpush1.msra.mxu0 0.0
    %774 = vmatprep.subr.mxu0 0.0
    %775 = vmatpush1.msra.mxu0 0.0
    %776 = vmatprep.subr.mxu0 0.0
    %777 = vmatpush1.msra.mxu0 0.0
    %778 = vmatprep.subr.mxu0 0.0
    %779 = vmatpush1.msra.mxu0 0.0
    %780 = vmatprep.subr.mxu0 0.0
    %781 = vmatpush1.msra.mxu0 0.0
    %782 = vmatprep.subr.mxu0 0.0
    %783 = vmatpush1.msra.mxu0 0.0
    %784 = vmatprep.subr.mxu0 0.0
    %785 = vmatpush1.msra.mxu0 0.0
    %786 = vmatprep.subr.mxu0 0.0
    %787 = vmatpush1.msra.mxu0 0.0
    %788 = vmatprep.subr.mxu0 0.0
    %789 = vmatpush1.msra.mxu0 0.0
    %790 = vmatprep.subr.mxu0 0.0
    %791 = vmatpush1.msra.mxu0 0.0
    %792 = vmatprep.subr.mxu0 0.0
    %793 = vmatpush1.msra.mxu0 0.0
    %794 = vmatprep.subr.mxu0 0.0
    %795 = vmatpush1.msra.mxu0 0.0
    %796 = vmatprep.mubr.f32.mxu0 0.0
    %797 = vmatmul.mubr.f32.gmra.mrb[0].mxu0 %v727
    %v798 = vpop.f32.mrb[0].mxu0
    %v799 = vadd.f32 %v718, %v798
    %v800 = vpop.f32.mrb[0].mxu0
    %801 = vmatprep.mubr.f32.mxu0 0.0
    %802 = vmatmul.mubr.f32.gmra.mrb[0].mxu0 %v730
    %v803 = vpop.f32.mrb[0].mxu0
    %v804 = vadd.f32 %v723, %v803
    %v805 = vpop.f32.mrb[0].mxu0
    %806 = vdwg.mxu0
    %v807 = vld [vmem:[%s4] sm:$0x1]
    %v809 = vlaneseq
    %v810 = vshrl.u32 %v809, 7
    %v811 = vsub.s32 0, %v810
    %v812 = vrot.slane %v807, %v811
    %v814 = vadd.f32 %v799, %v812
    %v815 = vadd.f32 %v804, %v812
    %v816 = vadd.f32 %v814, %v94
    %v817 = vadd.f32 %v815, %v95
    %v818 = vld [vmem:[#allocation5] sm:$0x1]
    %v819 = vld [vmem:[#allocation7] sm:$0x1]
    %v820 = vsel %vm107, %v816, 0.0
    %821 = vadd.xlane.f32.xlu0 %v820
    %v822 = vpop.xlane.xlu0 %821
    %v823 = vsel %vm107, %v817, 0.0
    %824 = vadd.xlane.f32.xlu0 %v823
    %v825 = vpop.xlane.xlu0 %824
    %v826 = vrcp.pop 32.0
    %v827 = vmul.f32 %v822, %v826
    %v828 = vmul.f32 %v825, %v826
    %v829 = vsub.f32 %v816, %v827
    %v830 = vsub.f32 %v817, %v828
    %v831 = vmul.f32 %v829, %v829
    %v832 = vmul.f32 %v830, %v830
    %v833 = vsel %vm107, %v831, 0.0
    %834 = vadd.xlane.f32.xlu0 %v833
    %v835 = vpop.xlane.xlu0 %834
    %v836 = vsel %vm107, %v832, 0.0
    %837 = vadd.xlane.f32.xlu0 %v836
    %v838 = vpop.xlane.xlu0 %837
    %v839 = vmul.f32 %v835, %v826
    %v840 = vmul.f32 %v838, %v826
    %v841 = vadd.f32 %v839, 1e-06
    %v842 = vadd.f32 %v840, 1e-06
    %v843 = vrsqrt.pop %v841
    %v844 = vrsqrt.pop %v842
    %v845 = vmul.f32 %v829, %v843
    %v846 = vmul.f32 %v830, %v844
    %v848 = vlaneseq
    %v849 = vshrl.u32 %v848, 7
    %v850 = vsub.s32 0, %v849
    %v851 = vrot.slane %v818, %v850
    %v853 = vmul.f32 %v845, %v851
    %v854 = vmul.f32 %v846, %v851
    %v856 = vlaneseq
    %v857 = vshrl.u32 %v856, 7
    %v858 = vsub.s32 0, %v857
    %v859 = vrot.slane %v819, %v858
    %v861 = vadd.f32 %v853, %v859
    %v862 = vadd.f32 %v854, %v859
    %v863 = vld [vmem:[%s7] sm:$0xff]
    %v864 = vld [vmem:[%s7 + $0x8] sm:$0xff]
    %v865 = vld [vmem:[%s7 + $0x10] sm:$0xff]
    %v866 = vld [vmem:[%s7 + $0x18] sm:$0xff]
    %v867 = vld [vmem:[#allocation8] sm:$0x1]
    %v869 = vlaneseq
    %v870 = vshrl.u32 %v869, 7
    %v871 = vsub.s32 0, %v870
    %v872 = vrot.slane %v867, %v871
    %v875 = vsel %vm107, %v861, 0
    %v878 = vsel %vm107, %v862, 0
    %880 = vmatprep.subr.mxu0 0.0
    %881 = vmatpush1.msra.mxu0 %v863
    %882 = vmatprep.subr.mxu0 0.0
    %883 = vmatpush1.msra.mxu0 %v864
    %884 = vmatprep.subr.mxu0 0.0
    %885 = vmatpush1.msra.mxu0 %v865
    %886 = vmatprep.subr.mxu0 0.0
    %887 = vmatpush1.msra.mxu0 %v866
    %888 = vmatprep.subr.mxu0 0.0
    %889 = vmatpush1.msra.mxu0 0.0
    %890 = vmatprep.subr.mxu0 0.0
    %891 = vmatpush1.msra.mxu0 0.0
    %892 = vmatprep.subr.mxu0 0.0
    %893 = vmatpush1.msra.mxu0 0.0
    %894 = vmatprep.subr.mxu0 0.0
    %895 = vmatpush1.msra.mxu0 0.0
    %896 = vmatprep.subr.mxu0 0.0
    %897 = vmatpush1.msra.mxu0 0.0
    %898 = vmatprep.subr.mxu0 0.0
    %899 = vmatpush1.msra.mxu0 0.0
    %900 = vmatprep.subr.mxu0 0.0
    %901 = vmatpush1.msra.mxu0 0.0
    %902 = vmatprep.subr.mxu0 0.0
    %903 = vmatpush1.msra.mxu0 0.0
    %904 = vmatprep.subr.mxu0 0.0
    %905 = vmatpush1.msra.mxu0 0.0
    %906 = vmatprep.subr.mxu0 0.0
    %907 = vmatpush1.msra.mxu0 0.0
    %908 = vmatprep.subr.mxu0 0.0
    %909 = vmatpush1.msra.mxu0 0.0
    %910 = vmatprep.subr.mxu0 0.0
    %911 = vmatpush1.msra.mxu0 0.0
    %912 = vmatprep.subr.mxu0 0.0
    %913 = vmatpush1.msra.mxu0 0.0
    %914 = vmatprep.subr.mxu0 0.0
    %915 = vmatpush1.msra.mxu0 0.0
    %916 = vmatprep.subr.mxu0 0.0
    %917 = vmatpush1.msra.mxu0 0.0
    %918 = vmatprep.subr.mxu0 0.0
    %919 = vmatpush1.msra.mxu0 0.0
    %920 = vmatprep.subr.mxu0 0.0
    %921 = vmatpush1.msra.mxu0 0.0
    %922 = vmatprep.subr.mxu0 0.0
    %923 = vmatpush1.msra.mxu0 0.0
    %924 = vmatprep.subr.mxu0 0.0
    %925 = vmatpush1.msra.mxu0 0.0
    %926 = vmatprep.subr.mxu0 0.0
    %927 = vmatpush1.msra.mxu0 0.0
    %928 = vmatprep.subr.mxu0 0.0
    %929 = vmatpush1.msra.mxu0 0.0
    %930 = vmatprep.subr.mxu0 0.0
    %931 = vmatpush1.msra.mxu0 0.0
    %932 = vmatprep.subr.mxu0 0.0
    %933 = vmatpush1.msra.mxu0 0.0
    %934 = vmatprep.subr.mxu0 0.0
    %935 = vmatpush1.msra.mxu0 0.0
    %936 = vmatprep.subr.mxu0 0.0
    %937 = vmatpush1.msra.mxu0 0.0
    %938 = vmatprep.subr.mxu0 0.0
    %939 = vmatpush1.msra.mxu0 0.0
    %940 = vmatprep.subr.mxu0 0.0
    %941 = vmatpush1.msra.mxu0 0.0
    %942 = vmatprep.subr.mxu0 0.0
    %943 = vmatpush1.msra.mxu0 0.0
    %944 = vmatprep.mubr.f32.mxu0 0.0
    %945 = vmatmul.mubr.f32.gmra.mrb[0].mxu0 %v875
    %v946 = vpop.f32.mrb[0].mxu0
    %v947 = vadd.f32 %v872, %v946
    %v948 = vpop.f32.mrb[0].mxu0
    %949 = vmatprep.mubr.f32.mxu0 0.0
    %950 = vmatmul.mubr.f32.gmra.mrb[0].mxu0 %v878
    %v951 = vpop.f32.mrb[0].mxu0
    %v952 = vadd.f32 %v872, %v951
    %v953 = vpop.f32.mrb[0].mxu0
    %954 = vdwg.mxu0
    %v955 = vmax.f32 %v947, 0.0
    %v956 = vmax.f32 %v952, 0.0
    %v957 = vld [vmem:[%s9] sm:$0xff]
    %v958 = vld [vmem:[%s9 + $0x8] sm:$0xff]
    %v959 = vld [vmem:[%s9 + $0x10] sm:$0xff]
    %v960 = vld [vmem:[%s9 + $0x18] sm:$0xff]
    %v961 = vld [vmem:[%s9 + $0x20] sm:$0xff]
    %v962 = vld [vmem:[%s9 + $0x28] sm:$0xff]
    %v963 = vld [vmem:[%s9 + $0x30] sm:$0xff]
    %v964 = vld [vmem:[%s9 + $0x38] sm:$0xff]
    %v965 = vld [vmem:[%s10] sm:$0x1]
    %v967 = vlaneseq
    %v968 = vshrl.u32 %v967, 7
    %v969 = vsub.s32 0, %v968
    %v970 = vrot.slane %v965, %v969
    %vm972 = vcmask 523264
    %v974 = vsel %vm972, %v955, 0
    %v977 = vsel %vm972, %v956, 0
    %979 = vmatprep.subr.mxu0 0.0
    %980 = vmatpush1.msra.mxu0 %v957
    %981 = vmatprep.subr.mxu0 0.0
    %982 = vmatpush1.msra.mxu0 %v958
    %983 = vmatprep.subr.mxu0 0.0
    %984 = vmatpush1.msra.mxu0 %v959
    %985 = vmatprep.subr.mxu0 0.0
    %986 = vmatpush1.msra.mxu0 %v960
    %987 = vmatprep.subr.mxu0 0.0
    %988 = vmatpush1.msra.mxu0 %v961
    %989 = vmatprep.subr.mxu0 0.0
    %990 = vmatpush1.msra.mxu0 %v962
    %991 = vmatprep.subr.mxu0 0.0
    %992 = vmatpush1.msra.mxu0 %v963
    %993 = vmatprep.subr.mxu0 0.0
    %994 = vmatpush1.msra.mxu0 %v964
    %995 = vmatprep.subr.mxu0 0.0
    %996 = vmatpush1.msra.mxu0 0.0
    %997 = vmatprep.subr.mxu0 0.0
    %998 = vmatpush1.msra.mxu0 0.0
    %999 = vmatprep.subr.mxu0 0.0
    %1000 = vmatpush1.msra.mxu0 0.0
    %1001 = vmatprep.subr.mxu0 0.0
    %1002 = vmatpush1.msra.mxu0 0.0
    %1003 = vmatprep.subr.mxu0 0.0
    %1004 = vmatpush1.msra.mxu0 0.0
    %1005 = vmatprep.subr.mxu0 0.0
    %1006 = vmatpush1.msra.mxu0 0.0
    %1007 = vmatprep.subr.mxu0 0.0
    %1008 = vmatpush1.msra.mxu0 0.0
    %1009 = vmatprep.subr.mxu0 0.0
    %1010 = vmatpush1.msra.mxu0 0.0
    %1011 = vmatprep.subr.mxu0 0.0
    %1012 = vmatpush1.msra.mxu0 0.0
    %1013 = vmatprep.subr.mxu0 0.0
    %1014 = vmatpush1.msra.mxu0 0.0
    %1015 = vmatprep.subr.mxu0 0.0
    %1016 = vmatpush1.msra.mxu0 0.0
    %1017 = vmatprep.subr.mxu0 0.0
    %1018 = vmatpush1.msra.mxu0 0.0
    %1019 = vmatprep.subr.mxu0 0.0
    %1020 = vmatpush1.msra.mxu0 0.0
    %1021 = vmatprep.subr.mxu0 0.0
    %1022 = vmatpush1.msra.mxu0 0.0
    %1023 = vmatprep.subr.mxu0 0.0
    %1024 = vmatpush1.msra.mxu0 0.0
    %1025 = vmatprep.subr.mxu0 0.0
    %1026 = vmatpush1.msra.mxu0 0.0
    %1027 = vmatprep.subr.mxu0 0.0
    %1028 = vmatpush1.msra.mxu0 0.0
    %1029 = vmatprep.subr.mxu0 0.0
    %1030 = vmatpush1.msra.mxu0 0.0
    %1031 = vmatprep.subr.mxu0 0.0
    %1032 = vmatpush1.msra.mxu0 0.0
    %1033 = vmatprep.subr.mxu0 0.0
    %1034 = vmatpush1.msra.mxu0 0.0
    %1035 = vmatprep.subr.mxu0 0.0
    %1036 = vmatpush1.msra.mxu0 0.0
    %1037 = vmatprep.subr.mxu0 0.0
    %1038 = vmatpush1.msra.mxu0 0.0
    %1039 = vmatprep.subr.mxu0 0.0
    %1040 = vmatpush1.msra.mxu0 0.0
    %1041 = vmatprep.subr.mxu0 0.0
    %1042 = vmatpush1.msra.mxu0 0.0
    %1043 = vmatprep.mubr.f32.mxu0 0.0
    %1044 = vmatmul.mubr.f32.gmra.mrb[0].mxu0 %v974
    %v1045 = vpop.f32.mrb[0].mxu0
    %v1046 = vadd.f32 %v970, %v1045
    %v1047 = vpop.f32.mrb[0].mxu0
    %1048 = vmatprep.mubr.f32.mxu0 0.0
    %1049 = vmatmul.mubr.f32.gmra.mrb[0].mxu0 %v977
    %v1050 = vpop.f32.mrb[0].mxu0
    %v1051 = vadd.f32 %v970, %v1050
    %v1052 = vpop.f32.mrb[0].mxu0
    %1053 = vdwg.mxu0
    %v1054 = vadd.f32 %v861, %v1046
    %v1055 = vadd.f32 %v862, %v1051
    %v1056 = vld [vmem:[%s11] sm:$0x1]
    %v1057 = vld [vmem:[%s12] sm:$0x1]
    %v1058 = vsel %vm107, %v1054, 0.0
    %1059 = vadd.xlane.f32.xlu0 %v1058
    %v1060 = vpop.xlane.xlu0 %1059
    %v1061 = vsel %vm107, %v1055, 0.0
    %1062 = vadd.xlane.f32.xlu0 %v1061
    %v1063 = vpop.xlane.xlu0 %1062
    %v1064 = vmul.f32 %v1060, %v826
    %v1065 = vmul.f32 %v1063, %v826
    %v1066 = vsub.f32 %v1054, %v1064
    %v1067 = vsub.f32 %v1055, %v1065
    %v1068 = vmul.f32 %v1066, %v1066
    %v1069 = vmul.f32 %v1067, %v1067
    %v1070 = vsel %vm107, %v1068, 0.0
    %1071 = vadd.xlane.f32.xlu0 %v1070
    %v1072 = vpop.xlane.xlu0 %1071
    %v1073 = vsel %vm107, %v1069, 0.0
    %1074 = vadd.xlane.f32.xlu0 %v1073
    %v1075 = vpop.xlane.xlu0 %1074
    %v1076 = vmul.f32 %v1072, %v826
    %v1077 = vmul.f32 %v1075, %v826
    %v1078 = vadd.f32 %v1076, 1e-06
    %v1079 = vadd.f32 %v1077, 1e-06
    %v1080 = vrsqrt.pop %v1078
    %v1081 = vrsqrt.pop %v1079
    %v1082 = vmul.f32 %v1066, %v1080
    %v1083 = vmul.f32 %v1067, %v1081
    %v1085 = vlaneseq
    %v1086 = vshrl.u32 %v1085, 7
    %v1087 = vsub.s32 0, %v1086
    %v1088 = vrot.slane %v1056, %v1087
    %v1090 = vmul.f32 %v1082, %v1088
    %v1091 = vmul.f32 %v1083, %v1088
    %v1093 = vlaneseq
    %v1094 = vshrl.u32 %v1093, 7
    %v1095 = vsub.s32 0, %v1094
    %v1096 = vrot.slane %v1057, %v1095
    %v1098 = vadd.f32 %v1090, %v1096
    %v1099 = vadd.f32 %v1091, %v1096
    %1100 = vst.msk [vmem:[#allocation10] sm:$0xff] %vm107, %v1098
    %1101 = vst.msk [vmem:[#allocation10 + $0x8] sm:$0xff] %vm107, %v1099
    // Predicated region
    $region70: #{tpu_custom_call.1} parent=1 // pred_check
      _
    $region71: #{tpu_custom_call.1} parent=1 // pred_check_branch
      %1103 = sbr.rel (0) target = $region73
    $region72: #{tpu_custom_call.1} parent=1 // pred_region
      %s1105 = ssub.s32 256, 256
      %1106 = vsyncadd [#allocation4], %s1105
      %s1107 = sshll.u32 [#allocation10], 4
      %s1108 = int_to_ptr.vmem [resolvable:$true] %s1107
      %1113 = dma.vmem_to_hbm [thread:$0]  %s1108, 256, %s13, [#allocation4], 128, 128, 8
    $region73: #{tpu_custom_call.1} parent=1 // pred_fallthru
      _
    // Predicated region
    $region74: #{tpu_custom_call.1} parent=1 // pred_check
      _
    $region75: #{tpu_custom_call.1} parent=1 // pred_check_branch
      %1115 = sbr.rel (0) target = $region77
    $region76: #{tpu_custom_call.1} parent=1 // pred_region
      %1116 = dma.done [#allocation4], 256
    $region77: #{tpu_custom_call.1} parent=1 // pred_fallthru
      _
    %1117 = vsyncpa [#allocation3], 1
    %1118 = vsyncpa [#allocation6], 1
    %1119 = vsyncpa [#allocation9], 1
    %1120 = vsyncpa [#allocation4], 1

</llo_original>
